<compile_context>
chip_gen: v5e
topology: v5e:2x2
jax: 0.10.0
libtpu: 0.0.40
codegen_flags: <defaults>
</compile_context>

<pallas_src>
import jax
import jax.numpy as jnp
from jax.experimental import pallas as pl
from jax.experimental.pallas import tpu as pltpu

NEG_SLOPE = 0.01
BN_EPS = 1e-5
OUT_PAD = 128  # lane-dense padded output width (multiple of 128)


def _leaky_relu(v):
    return jnp.where(v > 0, v, NEG_SLOPE * v)


def _round_up(n, m):
    return (n + m - 1) // m * m


# ---------------------------------------------------------------------------
# Kernel
# ---------------------------------------------------------------------------
def resnet_kernel(x_ref, w12_ref, w2b_ref, w3a_ref, w3b_ref, w4a_ref, w4b_ref,
                  w5a_ref, w5b_ref, bias_ref, out_ref):
    f32 = jnp.float32
    bf16 = jnp.bfloat16
    H = w2b_ref.shape[0]          # hidden size (256)
    out_w = out_ref.shape[1]      # padded output width (128)

    # packed per-layer biases (already BN-folded, f32)
    b1 = bias_ref[0:1, :]
    b2 = bias_ref[1:2, :]
    b3 = bias_ref[2:3, :]
    b4 = bias_ref[3:4, :]
    b5 = bias_ref[4:5, :out_w]

    x = x_ref[...]                # bf16, bn0 already folded into w12

    # fused dense1 + dense2a: one K=in_f matmul -> (tile, 2H) f32, then slice.
    y12 = jnp.dot(x, w12_ref[...], preferred_element_type=f32)

    # dense1 (+bn0, bn1 folded) -> LeakyReLU (dropout = identity at eval)
    x1 = _leaky_relu(y12[:, :H] + b1).astype(bf16)

    # dense2(cat([x, x1])) (+bn0, bn2 folded): x@w2a already in y12[:, H:]
    x2 = _leaky_relu(
        y12[:, H:]
        + jnp.dot(x1, w2b_ref[...], preferred_element_type=f32)
        + b2).astype(bf16)

    # dense3(cat([x1, x2])) (+bn3 folded) -> split K=H matmuls
    x3 = _leaky_relu(
        jnp.dot(x1, w3a_ref[...], preferred_element_type=f32)
        + jnp.dot(x2, w3b_ref[...], preferred_element_type=f32)
        + b3).astype(bf16)

    # dense4(cat([x2, x3])) (+bn4 folded)
    x4 = _leaky_relu(
        jnp.dot(x2, w4a_ref[...], preferred_element_type=f32)
        + jnp.dot(x3, w4b_ref[...], preferred_element_type=f32)
        + b4).astype(bf16)

    # dense5(cat([x3, x4])) -> lane-dense padded f32 output
    out_ref[...] = (
        jnp.dot(x3, w5a_ref[...], preferred_element_type=f32)
        + jnp.dot(x4, w5b_ref[...], preferred_element_type=f32)
        + b5)


# ---------------------------------------------------------------------------
# Wrapper
# ---------------------------------------------------------------------------
def resnet_forward(x, kp, *, batch_tile=None):
    """Forward pass. `kp` comes from fold_params()."""
    batch, in_f = x.shape
    H = kp["w2b"].shape[0]
    out_pad = kp["w5a"].shape[1]
    out_features = kp["out_features"]

    # Tile selection: multiples of 16 (bf16 sublane packing); split into >= 2
    # grid steps when the batch allows so "parallel" shards across v7x's 2 TCs.
    if batch_tile is None:
        padded16 = _round_up(batch, 16)
        if padded16 >= 1024:
            batch_tile = 512
        elif padded16 >= 32:
            batch_tile = _round_up((padded16 + 1) // 2, 16)
        else:
            batch_tile = padded16
    else:
        batch_tile = _round_up(batch_tile, 16)

    padded = _round_up(batch, batch_tile)
    x = x.astype(jnp.bfloat16)
    if padded != batch:
        x = jnp.pad(x, ((0, padded - batch), (0, 0)))
    grid = (padded // batch_tile,)

    row_map = lambda i: (i, 0)     # batch-tiled arrays
    const_map = lambda i: (0, 0)   # VMEM-resident weights (no re-DMA across steps)

    weight_names = ("w12", "w2b", "w3a", "w3b", "w4a", "w4b", "w5a", "w5b")
    weight_specs = [pl.BlockSpec(kp[n].shape, const_map) for n in weight_names]
    bias_spec = pl.BlockSpec(kp["bias"].shape, const_map)

    out = pl.pallas_call(
        resnet_kernel,
        out_shape=jax.ShapeDtypeStruct((padded, out_pad), jnp.float32),
        grid_spec=pltpu.PrefetchScalarGridSpec(
            num_scalar_prefetch=0,
            grid=grid,
            in_specs=[pl.BlockSpec((batch_tile, in_f), row_map)]
                     + weight_specs + [bias_spec],
            out_specs=pl.BlockSpec((batch_tile, out_pad), row_map),
        ),
        compiler_params=pltpu.CompilerParams(
            dimension_semantics=("parallel",),
            vmem_limit_bytes=32 * 1024 * 1024),
    )(x, *(kp[n] for n in weight_names), kp["bias"])

    return out[:batch, :out_features]


# ---------------------------------------------------------------------------
# Parameters: raw (PyTorch-equivalent) + folding into kernel form
# ---------------------------------------------------------------------------
def make_raw_params(key, input_size, hidden_size, output_size):
    """Deterministic synthetic parameters mirroring the PyTorch module (eval)."""
    ks = iter(jax.random.split(key, 64))

    def lin(in_f, out_f):
        # stored as (in, out) so forward is x @ W + b
        w = jax.random.normal(next(ks), (in_f, out_f), jnp.float32) * 0.05
        b = jax.random.normal(next(ks), (1, out_f), jnp.float32) * 0.05
        return w, b

    def bn(dim):
        gamma = 1.0 + 0.1 * jax.random.normal(next(ks), (1, dim), jnp.float32)
        beta = 0.1 * jax.random.normal(next(ks), (1, dim), jnp.float32)
        mean = 0.1 * jax.random.normal(next(ks), (1, dim), jnp.float32)
        var = 0.5 + jnp.abs(jax.random.normal(next(ks), (1, dim), jnp.float32))
        scale = gamma / jnp.sqrt(var + BN_EPS)
        shift = beta - mean * scale
        return scale, shift

    p = {}
    p["bn0_s"], p["bn0_b"] = bn(input_size)
    p["w1"], p["b1"] = lin(input_size, hidden_size)
    p["bn1_s"], p["bn1_b"] = bn(hidden_size)
    p["w2"], p["b2"] = lin(input_size + hidden_size, hidden_size)
    p["bn2_s"], p["bn2_b"] = bn(hidden_size)
    p["w3"], p["b3"] = lin(2 * hidden_size, hidden_size)
    p["bn3_s"], p["bn3_b"] = bn(hidden_size)
    p["w4"], p["b4"] = lin(2 * hidden_size, hidden_size)
    p["bn4_s"], p["bn4_b"] = bn(hidden_size)
    p["w5"], p["b5"] = lin(2 * hidden_size, output_size)
    return p


def fold_params(p, input_size, hidden_size, output_size, out_pad=OUT_PAD):
    """Fold BN into the Linears, fuse/split concat weights, pack biases, bf16."""
    H = hidden_size
    assert output_size <= out_pad <= H, "bias packing assumes out_pad <= hidden"

    s0, t0 = p["bn0_s"], p["bn0_b"]
    s1, t1 = p["bn1_s"], p["bn1_b"]
    s2, t2 = p["bn2_s"], p["bn2_b"]
    s3, t3 = p["bn3_s"], p["bn3_b"]
    s4, t4 = p["bn4_s"], p["bn4_b"]

    # dense1: bn1(bn0(x) @ W1 + b1)  ->  x @ W1' + b1'
    w1s = p["w1"] * s1
    w1f = s0.reshape(-1, 1) * w1s
    b1f = t0 @ w1s + p["b1"] * s1 + t1

    # dense2: bn2(cat([bn0(x), x1]) @ W2 + b2)  ->  x @ W2a' + x1 @ W2b' + b2'
    w2a, w2b = p["w2"][:input_size], p["w2"][input_size:]
    w2as = w2a * s2
    w2af = s0.reshape(-1, 1) * w2as
    w2bf = w2b * s2
    b2f = t0 @ w2as + p["b2"] * s2 + t2

    # fuse dense1 + dense2a into a single (in, 2H) weight (one K=in matmul)
    w12f = jnp.concatenate([w1f, w2af], axis=1)

    # dense3/dense4: bn folded into the concatenated weight; pre-split halves
    w3f = p["w3"] * s3
    b3f = p["b3"] * s3 + t3
    w4f = p["w4"] * s4
    b4f = p["b4"] * s4 + t4

    # dense5: no bn; pad output columns to a lane-dense width (zeros); split
    w5f = jnp.zeros((2 * H, out_pad), jnp.float32).at[:, :output_size].set(p["w5"])
    b5f = jnp.zeros((1, out_pad), jnp.float32).at[:, :output_size].set(p["b5"])

    # pack all per-layer biases into a single (8, H) f32 array (one DMA)
    bias = jnp.zeros((8, H), jnp.float32)
    bias = bias.at[0, :].set(b1f[0])
    bias = bias.at[1, :].set(b2f[0])
    bias = bias.at[2, :].set(b3f[0])
    bias = bias.at[3, :].set(b4f[0])
    bias = bias.at[4, :out_pad].set(b5f[0])

    bf = lambda a: a.astype(jnp.bfloat16)
    return {
        "w12": bf(w12f),
        "w2b": bf(w2bf),
        "w3a": bf(w3f[:H]), "w3b": bf(w3f[H:]),
        "w4a": bf(w4f[:H]), "w4b": bf(w4f[H:]),
        "w5a": bf(w5f[:H]), "w5b": bf(w5f[H:]),
        "bias": bias,
        "out_features": output_size,
    }


# ---------------------------------------------------------------------------
# Pure-JAX f32 reference (mirrors the PyTorch forward in eval mode, unfolded)
# ---------------------------------------------------------------------------
def reference_forward(x, p):
    x = x * p["bn0_s"] + p["bn0_b"]
    x1 = _leaky_relu((x @ p["w1"] + p["b1"]) * p["bn1_s"] + p["bn1_b"])
    x2 = _leaky_relu(
        (jnp.concatenate([x, x1], 1) @ p["w2"] + p["b2"]) * p["bn2_s"] + p["bn2_b"])
    x3 = _leaky_relu(
        (jnp.concatenate([x1, x2], 1) @ p["w3"] + p["b3"]) * p["bn3_s"] + p["bn3_b"])
    x4 = _leaky_relu(
        (jnp.concatenate([x2, x3], 1) @ p["w4"] + p["b4"]) * p["bn4_s"] + p["bn4_b"])
    return jnp.concatenate([x3, x4], 1) @ p["w5"] + p["b5"]


if __name__ == "__main__":
    INPUT_SIZE = 32
    OUTPUT_SIZE = 8
    HIDDEN_SIZE = 256
    BATCH = 8

    key = jax.random.PRNGKey(0)
    kx, kparam = jax.random.split(key)
    x = jax.random.normal(kx, (BATCH, INPUT_SIZE), jnp.float32)

    raw = make_raw_params(kparam, INPUT_SIZE, HIDDEN_SIZE, OUTPUT_SIZE)
    kp = fold_params(raw, INPUT_SIZE, HIDDEN_SIZE, OUTPUT_SIZE)

    out = jax.block_until_ready(resnet_forward(x, kp))
    ref = jax.block_until_ready(reference_forward(x, raw))

    assert out.shape == (BATCH, OUTPUT_SIZE), out.shape
    max_err = float(jnp.max(jnp.abs(out - ref)))
    # bf16 weights / bf16 input + activation operands -> loosened tolerance
    assert jnp.allclose(out, ref, atol=3e-2, rtol=3e-2), (
        f"mismatch vs reference (max abs err {max_err})")
    print("KERNEL_OK")
</pallas_src>

<mosaic_0001>
module attributes {stable_mosaic.version = 11 : i64} {
  func.func @resnet_kernel(%arg0: i32, %arg1: memref<16x32xbf16, #tpu.memory_space<vmem>>, %arg2: memref<32x512xbf16, #tpu.memory_space<vmem>>, %arg3: memref<256x256xbf16, #tpu.memory_space<vmem>>, %arg4: memref<256x256xbf16, #tpu.memory_space<vmem>>, %arg5: memref<256x256xbf16, #tpu.memory_space<vmem>>, %arg6: memref<256x256xbf16, #tpu.memory_space<vmem>>, %arg7: memref<256x256xbf16, #tpu.memory_space<vmem>>, %arg8: memref<256x128xbf16, #tpu.memory_space<vmem>>, %arg9: memref<256x128xbf16, #tpu.memory_space<vmem>>, %arg10: memref<8x256xf32, #tpu.memory_space<vmem>>, %arg11: memref<16x128xf32, #tpu.memory_space<vmem>>) attributes {dimension_semantics = [#tpu.dimension_semantics<parallel>], iteration_bounds = array<i64: 1>, scalar_prefetch = 0 : i64, scratch_operands = 0 : i64, tpu.core_type = #tpu.core_type<tc>, window_params = [{transform_indices = @transform_0, window_bounds = array<i64: 16, 32>}, {pipeline_mode = #tpu.pipeline_mode<synchronous>, transform_indices = @transform_1, window_bounds = array<i64: 32, 512>}, {pipeline_mode = #tpu.pipeline_mode<synchronous>, transform_indices = @transform_2, window_bounds = array<i64: 256, 256>}, {pipeline_mode = #tpu.pipeline_mode<synchronous>, transform_indices = @transform_3, window_bounds = array<i64: 256, 256>}, {pipeline_mode = #tpu.pipeline_mode<synchronous>, transform_indices = @transform_4, window_bounds = array<i64: 256, 256>}, {pipeline_mode = #tpu.pipeline_mode<synchronous>, transform_indices = @transform_5, window_bounds = array<i64: 256, 256>}, {pipeline_mode = #tpu.pipeline_mode<synchronous>, transform_indices = @transform_6, window_bounds = array<i64: 256, 256>}, {pipeline_mode = #tpu.pipeline_mode<synchronous>, transform_indices = @transform_7, window_bounds = array<i64: 256, 128>}, {pipeline_mode = #tpu.pipeline_mode<synchronous>, transform_indices = @transform_8, window_bounds = array<i64: 256, 128>}, {pipeline_mode = #tpu.pipeline_mode<synchronous>, transform_indices = @transform_9, window_bounds = array<i64: 8, 256>}, {transform_indices = @transform_10, window_bounds = array<i64: 16, 128>}]} {
    %c0 = arith.constant 0 : index
    %c0_0 = arith.constant 0 : index
    %0 = vector.load %arg10[%c0, %c0_0] : memref<8x256xf32, #tpu.memory_space<vmem>>, vector<1x256xf32>
    %c1 = arith.constant 1 : index
    %c0_1 = arith.constant 0 : index
    %1 = vector.load %arg10[%c1, %c0_1] : memref<8x256xf32, #tpu.memory_space<vmem>>, vector<1x256xf32>
    %c2 = arith.constant 2 : index
    %c0_2 = arith.constant 0 : index
    %2 = vector.load %arg10[%c2, %c0_2] : memref<8x256xf32, #tpu.memory_space<vmem>>, vector<1x256xf32>
    %c3 = arith.constant 3 : index
    %c0_3 = arith.constant 0 : index
    %3 = vector.load %arg10[%c3, %c0_3] : memref<8x256xf32, #tpu.memory_space<vmem>>, vector<1x256xf32>
    %c4 = arith.constant 4 : index
    %c0_4 = arith.constant 0 : index
    %4 = vector.load %arg10[%c4, %c0_4] : memref<8x256xf32, #tpu.memory_space<vmem>>, vector<1x128xf32>
    %c0_5 = arith.constant 0 : index
    %c0_6 = arith.constant 0 : index
    %5 = vector.load %arg1[%c0_5, %c0_6] : memref<16x32xbf16, #tpu.memory_space<vmem>>, vector<16x32xbf16>
    %c0_7 = arith.constant 0 : index
    %c0_8 = arith.constant 0 : index
    %6 = vector.load %arg2[%c0_7, %c0_8] : memref<32x512xbf16, #tpu.memory_space<vmem>>, vector<32x512xbf16>
    %cst = arith.constant dense<0.000000e+00> : vector<16x512xf32>
    %7 = tpu.matmul %5, %6, %cst {dimension_numbers = #tpu.dot_dimension_numbers<[1], [0], [0], [1], [0, 0, 1, 1], [], []>} : vector<16x32xbf16>, vector<32x512xbf16>, vector<16x512xf32> -> vector<16x512xf32>
    %8 = vector.extract_strided_slice %7 {offsets = [0, 0], sizes = [16, 256], strides = [1, 1]} : vector<16x512xf32> to vector<16x256xf32>
    %9 = vector.broadcast %0 : vector<1x256xf32> to vector<16x256xf32>
    %10 = arith.addf %8, %9 : vector<16x256xf32>
    %cst_9 = arith.constant 0.000000e+00 : f32
    %11 = vector.broadcast %cst_9 : f32 to vector<16x256xf32>
    %12 = arith.cmpf ogt, %10, %11 : vector<16x256xf32>
    %cst_10 = arith.constant 0.00999999977 : f32
    %13 = vector.broadcast %cst_10 : f32 to vector<16x256xf32>
    %14 = arith.mulf %13, %10 : vector<16x256xf32>
    %15 = arith.select %12, %10, %14 : vector<16x256xi1>, vector<16x256xf32>
    %16 = arith.truncf %15 : vector<16x256xf32> to vector<16x256xbf16>
    %17 = vector.extract_strided_slice %7 {offsets = [0, 256], sizes = [16, 256], strides = [1, 1]} : vector<16x512xf32> to vector<16x256xf32>
    %c0_11 = arith.constant 0 : index
    %c0_12 = arith.constant 0 : index
    %18 = vector.load %arg3[%c0_11, %c0_12] : memref<256x256xbf16, #tpu.memory_space<vmem>>, vector<256x256xbf16>
    %cst_13 = arith.constant dense<0.000000e+00> : vector<16x256xf32>
    %19 = tpu.matmul %16, %18, %cst_13 {dimension_numbers = #tpu.dot_dimension_numbers<[1], [0], [0], [1], [0, 0, 1, 1], [], []>} : vector<16x256xbf16>, vector<256x256xbf16>, vector<16x256xf32> -> vector<16x256xf32>
    %20 = arith.addf %17, %19 : vector<16x256xf32>
    %21 = vector.broadcast %1 : vector<1x256xf32> to vector<16x256xf32>
    %22 = arith.addf %20, %21 : vector<16x256xf32>
    %cst_14 = arith.constant 0.000000e+00 : f32
    %23 = vector.broadcast %cst_14 : f32 to vector<16x256xf32>
    %24 = arith.cmpf ogt, %22, %23 : vector<16x256xf32>
    %cst_15 = arith.constant 0.00999999977 : f32
    %25 = vector.broadcast %cst_15 : f32 to vector<16x256xf32>
    %26 = arith.mulf %25, %22 : vector<16x256xf32>
    %27 = arith.select %24, %22, %26 : vector<16x256xi1>, vector<16x256xf32>
    %28 = arith.truncf %27 : vector<16x256xf32> to vector<16x256xbf16>
    %c0_16 = arith.constant 0 : index
    %c0_17 = arith.constant 0 : index
    %29 = vector.load %arg4[%c0_16, %c0_17] : memref<256x256xbf16, #tpu.memory_space<vmem>>, vector<256x256xbf16>
    %cst_18 = arith.constant dense<0.000000e+00> : vector<16x256xf32>
    %30 = tpu.matmul %16, %29, %cst_18 {dimension_numbers = #tpu.dot_dimension_numbers<[1], [0], [0], [1], [0, 0, 1, 1], [], []>} : vector<16x256xbf16>, vector<256x256xbf16>, vector<16x256xf32> -> vector<16x256xf32>
    %c0_19 = arith.constant 0 : index
    %c0_20 = arith.constant 0 : index
    %31 = vector.load %arg5[%c0_19, %c0_20] : memref<256x256xbf16, #tpu.memory_space<vmem>>, vector<256x256xbf16>
    %cst_21 = arith.constant dense<0.000000e+00> : vector<16x256xf32>
    %32 = tpu.matmul %28, %31, %cst_21 {dimension_numbers = #tpu.dot_dimension_numbers<[1], [0], [0], [1], [0, 0, 1, 1], [], []>} : vector<16x256xbf16>, vector<256x256xbf16>, vector<16x256xf32> -> vector<16x256xf32>
    %33 = arith.addf %30, %32 : vector<16x256xf32>
    %34 = vector.broadcast %2 : vector<1x256xf32> to vector<16x256xf32>
    %35 = arith.addf %33, %34 : vector<16x256xf32>
    %cst_22 = arith.constant 0.000000e+00 : f32
    %36 = vector.broadcast %cst_22 : f32 to vector<16x256xf32>
    %37 = arith.cmpf ogt, %35, %36 : vector<16x256xf32>
    %cst_23 = arith.constant 0.00999999977 : f32
    %38 = vector.broadcast %cst_23 : f32 to vector<16x256xf32>
    %39 = arith.mulf %38, %35 : vector<16x256xf32>
    %40 = arith.select %37, %35, %39 : vector<16x256xi1>, vector<16x256xf32>
    %41 = arith.truncf %40 : vector<16x256xf32> to vector<16x256xbf16>
    %c0_24 = arith.constant 0 : index
    %c0_25 = arith.constant 0 : index
    %42 = vector.load %arg6[%c0_24, %c0_25] : memref<256x256xbf16, #tpu.memory_space<vmem>>, vector<256x256xbf16>
    %cst_26 = arith.constant dense<0.000000e+00> : vector<16x256xf32>
    %43 = tpu.matmul %28, %42, %cst_26 {dimension_numbers = #tpu.dot_dimension_numbers<[1], [0], [0], [1], [0, 0, 1, 1], [], []>} : vector<16x256xbf16>, vector<256x256xbf16>, vector<16x256xf32> -> vector<16x256xf32>
    %c0_27 = arith.constant 0 : index
    %c0_28 = arith.constant 0 : index
    %44 = vector.load %arg7[%c0_27, %c0_28] : memref<256x256xbf16, #tpu.memory_space<vmem>>, vector<256x256xbf16>
    %cst_29 = arith.constant dense<0.000000e+00> : vector<16x256xf32>
    %45 = tpu.matmul %41, %44, %cst_29 {dimension_numbers = #tpu.dot_dimension_numbers<[1], [0], [0], [1], [0, 0, 1, 1], [], []>} : vector<16x256xbf16>, vector<256x256xbf16>, vector<16x256xf32> -> vector<16x256xf32>
    %46 = arith.addf %43, %45 : vector<16x256xf32>
    %47 = vector.broadcast %3 : vector<1x256xf32> to vector<16x256xf32>
    %48 = arith.addf %46, %47 : vector<16x256xf32>
    %cst_30 = arith.constant 0.000000e+00 : f32
    %49 = vector.broadcast %cst_30 : f32 to vector<16x256xf32>
    %50 = arith.cmpf ogt, %48, %49 : vector<16x256xf32>
    %cst_31 = arith.constant 0.00999999977 : f32
    %51 = vector.broadcast %cst_31 : f32 to vector<16x256xf32>
    %52 = arith.mulf %51, %48 : vector<16x256xf32>
    %53 = arith.select %50, %48, %52 : vector<16x256xi1>, vector<16x256xf32>
    %54 = arith.truncf %53 : vector<16x256xf32> to vector<16x256xbf16>
    %c0_32 = arith.constant 0 : index
    %c0_33 = arith.constant 0 : index
    %55 = vector.load %arg8[%c0_32, %c0_33] : memref<256x128xbf16, #tpu.memory_space<vmem>>, vector<256x128xbf16>
    %cst_34 = arith.constant dense<0.000000e+00> : vector<16x128xf32>
    %56 = tpu.matmul %41, %55, %cst_34 {dimension_numbers = #tpu.dot_dimension_numbers<[1], [0], [0], [1], [0, 0, 1, 1], [], []>} : vector<16x256xbf16>, vector<256x128xbf16>, vector<16x128xf32> -> vector<16x128xf32>
    %c0_35 = arith.constant 0 : index
    %c0_36 = arith.constant 0 : index
    %57 = vector.load %arg9[%c0_35, %c0_36] : memref<256x128xbf16, #tpu.memory_space<vmem>>, vector<256x128xbf16>
    %cst_37 = arith.constant dense<0.000000e+00> : vector<16x128xf32>
    %58 = tpu.matmul %54, %57, %cst_37 {dimension_numbers = #tpu.dot_dimension_numbers<[1], [0], [0], [1], [0, 0, 1, 1], [], []>} : vector<16x256xbf16>, vector<256x128xbf16>, vector<16x128xf32> -> vector<16x128xf32>
    %59 = arith.addf %56, %58 : vector<16x128xf32>
    %60 = vector.broadcast %4 : vector<1x128xf32> to vector<16x128xf32>
    %61 = arith.addf %59, %60 : vector<16x128xf32>
    %c0_38 = arith.constant 0 : index
    %c0_39 = arith.constant 0 : index
    %62 = vector.load %arg11[%c0_38, %c0_39] : memref<16x128xf32, #tpu.memory_space<vmem>>, vector<16x128xf32>
    tpu.vector_store %arg11[%c0_38, %c0_39], %61 {strides = array<i32>} : memref<16x128xf32, #tpu.memory_space<vmem>>, vector<16x128xf32>,
    return
  }
  func.func @transform_0(%arg0: i32) -> (i32, i32) {
    %c0_i32 = arith.constant 0 : i32
    %c0_i32_0 = arith.constant 0 : i32
    return %arg0, %c0_i32 : i32, i32
  }
  func.func @transform_1(%arg0: i32) -> (i32, i32) {
    %c0_i32 = arith.constant 0 : i32
    %c0_i32_0 = arith.constant 0 : i32
    %c0_i32_1 = arith.constant 0 : i32
    return %c0_i32, %c0_i32_0 : i32, i32
  }
  func.func @transform_2(%arg0: i32) -> (i32, i32) {
    %c0_i32 = arith.constant 0 : i32
    %c0_i32_0 = arith.constant 0 : i32
    %c0_i32_1 = arith.constant 0 : i32
    return %c0_i32, %c0_i32_0 : i32, i32
  }
  func.func @transform_3(%arg0: i32) -> (i32, i32) {
    %c0_i32 = arith.constant 0 : i32
    %c0_i32_0 = arith.constant 0 : i32
    %c0_i32_1 = arith.constant 0 : i32
    return %c0_i32, %c0_i32_0 : i32, i32
  }
  func.func @transform_4(%arg0: i32) -> (i32, i32) {
    %c0_i32 = arith.constant 0 : i32
    %c0_i32_0 = arith.constant 0 : i32
    %c0_i32_1 = arith.constant 0 : i32
    return %c0_i32, %c0_i32_0 : i32, i32
  }
  func.func @transform_5(%arg0: i32) -> (i32, i32) {
    %c0_i32 = arith.constant 0 : i32
    %c0_i32_0 = arith.constant 0 : i32
    %c0_i32_1 = arith.constant 0 : i32
    return %c0_i32, %c0_i32_0 : i32, i32
  }
  func.func @transform_6(%arg0: i32) -> (i32, i32) {
    %c0_i32 = arith.constant 0 : i32
    %c0_i32_0 = arith.constant 0 : i32
    %c0_i32_1 = arith.constant 0 : i32
    return %c0_i32, %c0_i32_0 : i32, i32
  }
  func.func @transform_7(%arg0: i32) -> (i32, i32) {
    %c0_i32 = arith.constant 0 : i32
    %c0_i32_0 = arith.constant 0 : i32
    %c0_i32_1 = arith.constant 0 : i32
    return %c0_i32, %c0_i32_0 : i32, i32
  }
  func.func @transform_8(%arg0: i32) -> (i32, i32) {
    %c0_i32 = arith.constant 0 : i32
    %c0_i32_0 = arith.constant 0 : i32
    %c0_i32_1 = arith.constant 0 : i32
    return %c0_i32, %c0_i32_0 : i32, i32
  }
  func.func @transform_9(%arg0: i32) -> (i32, i32) {
    %c0_i32 = arith.constant 0 : i32
    %c0_i32_0 = arith.constant 0 : i32
    %c0_i32_1 = arith.constant 0 : i32
    return %c0_i32, %c0_i32_0 : i32, i32
  }
  func.func @transform_10(%arg0: i32) -> (i32, i32) {
    %c0_i32 = arith.constant 0 : i32
    %c0_i32_0 = arith.constant 0 : i32
    return %arg0, %c0_i32 : i32, i32
  }
}

</mosaic_0001>

<llo_original>
// kernel: tpu_custom_call.1
$region0: #{tpu_custom_call.1}
  #allocation0 [shape = 'u32[]', space=smem, size = 0x4, offset = 0x4, fixed_abs, tag = 'smem constant byte address 0x4 - core index']
  #allocation1 [shape = 'u32[72,128]{1,0:T(1,128)}', space=vmem, size = 0x9000, scoped, tag = 'internal scratch']
  %s0 = inlined_call_operand.hbm [shape: bf16[16,32], index: 0, kind: input, shape index: {}]
  %s1 = inlined_call_operand.hbm [shape: bf16[32,512], index: 1, kind: input, shape index: {}]
  %s2 = inlined_call_operand.hbm [shape: bf16[256,256], index: 2, kind: input, shape index: {}]
  %s3 = inlined_call_operand.hbm [shape: bf16[256,256], index: 3, kind: input, shape index: {}]
  %s4 = inlined_call_operand.hbm [shape: bf16[256,256], index: 4, kind: input, shape index: {}]
  %s5 = inlined_call_operand.hbm [shape: bf16[256,256], index: 5, kind: input, shape index: {}]
  %s6 = inlined_call_operand.hbm [shape: bf16[256,256], index: 6, kind: input, shape index: {}]
  %s7 = inlined_call_operand.hbm [shape: bf16[256,128], index: 7, kind: input, shape index: {}]
  %s8 = inlined_call_operand.hbm [shape: bf16[256,128], index: 8, kind: input, shape index: {}]
  %s9 = inlined_call_operand.hbm [shape: f32[8,256], index: 9, kind: input, shape index: {}]
  %s10 = inlined_call_operand.hbm [shape: f32[16,128], index: 10, kind: output, shape index: {}]
  %s11 = sld [smem:[#allocation0]]
  $region90: #{tpu_custom_call.1} parent=0
    _
  %s13 = ssub.s32 1, %s11
  %s14 = scalar_select 0, %s13, %s11
  $region1: #{tpu_custom_call.1} parent=0
    #allocation2 [shape = 'u8[4096]{0}', space=vmem, size = 0x1000, scoped, tag = 'input window, operand 0, single buffered']
    #allocation3 [shape = 's32[1]{0}', space=sflag, size = 0x4, scoped, tag = 'scoped memory for tpu_custom_call.1']
    #allocation4 [shape = 's32[1]{0}', space=sflag, size = 0x4, scoped, tag = 'scoped memory for tpu_custom_call.1']
    #allocation5 [shape = 'u8[32768]{0}', space=vmem, size = 0x8000, scoped, tag = 'input window, operand 1, single buffered']
    #allocation6 [shape = 's32[1]{0}', space=sflag, size = 0x4, scoped, tag = 'scoped memory for tpu_custom_call.1']
    #allocation7 [shape = 'u8[131072]{0}', space=vmem, size = 0x20000, scoped, tag = 'input window, operand 2, single buffered']
    #allocation8 [shape = 'u8[131072]{0}', space=vmem, size = 0x20000, scoped, tag = 'input window, operand 3, single buffered']
    #allocation9 [shape = 's32[1]{0}', space=sflag, size = 0x4, scoped, tag = 'scoped memory for tpu_custom_call.1']
    #allocation10 [shape = 'u8[131072]{0}', space=vmem, size = 0x20000, scoped, tag = 'input window, operand 4, single buffered']
    #allocation11 [shape = 'u8[131072]{0}', space=vmem, size = 0x20000, scoped, tag = 'input window, operand 5, single buffered']
    #allocation12 [shape = 's32[1]{0}', space=sflag, size = 0x4, scoped, tag = 'scoped memory for tpu_custom_call.1']
    #allocation13 [shape = 'u8[131072]{0}', space=vmem, size = 0x20000, scoped, tag = 'input window, operand 6, single buffered']
    #allocation14 [shape = 'u8[65536]{0}', space=vmem, size = 0x10000, scoped, tag = 'input window, operand 7, single buffered']
    #allocation15 [shape = 's32[1]{0}', space=sflag, size = 0x4, scoped, tag = 'scoped memory for tpu_custom_call.1']
    #allocation16 [shape = 'u8[65536]{0}', space=vmem, size = 0x10000, scoped, tag = 'input window, operand 8, single buffered']
    #allocation17 [shape = 'u8[8192]{0}', space=vmem, size = 0x2000, scoped, tag = 'input window, operand 9, single buffered']
    #allocation18 [shape = 's32[1]{0}', space=sflag, size = 0x4, scoped, tag = 'scoped memory for tpu_custom_call.1']
    #allocation19 [shape = 'u8[8192]{0}', space=vmem, size = 0x2000, scoped, tag = 'output window, operand 0, single buffered']
    %15 = vsyncpa [#allocation3], 0
    %16 = vsyncpa [#allocation6], 0
    %17 = vsyncpa [#allocation9], 0
    %18 = vsyncpa [#allocation12], 0
    %19 = vsyncpa [#allocation15], 0
    %20 = vsyncpa [#allocation18], 0
    %21 = vsyncpa [#allocation4], 0
    // Predicated region
    $region2: #{tpu_custom_call.1} parent=1 // pred_check
      _
    $region3: #{tpu_custom_call.1} parent=1 // pred_check_branch
      %23 = sbr.rel (0) target = $region5
    $region4: #{tpu_custom_call.1} parent=1 // pred_region
      %25 = vsyncadd [#allocation3], 0
      %s26 = sshll.u32 %s0, 4
      %s27 = int_to_ptr.hbm [resolvable:$true] %s26
      %s28 = sshll.u32 [#allocation2], 4
      %s29 = int_to_ptr.vmem [resolvable:$true] %s28
      %34 = dma.hbm_to_vmem [thread:$0]  %s27, 128, %s29, [#allocation3], 64, 64, 4
    $region5: #{tpu_custom_call.1} parent=1 // pred_fallthru
      _
    // Predicated region
    $region6: #{tpu_custom_call.1} parent=1 // pred_check
      _
    $region7: #{tpu_custom_call.1} parent=1 // pred_check_branch
      %36 = sbr.rel (0) target = $region9
    $region8: #{tpu_custom_call.1} parent=1 // pred_region
      %38 = vsyncadd [#allocation6], 0
      %s39 = sshll.u32 %s1, 4
      %s40 = int_to_ptr.hbm [resolvable:$true] %s39
      %s41 = sshll.u32 [#allocation5], 4
      %s42 = int_to_ptr.vmem [resolvable:$true] %s41
      %47 = dma.hbm_to_vmem [thread:$0]  %s40, 1024, %s42, [#allocation6], 256, 256, 16
    $region9: #{tpu_custom_call.1} parent=1 // pred_fallthru
      _
    // Predicated region
    $region10: #{tpu_custom_call.1} parent=1 // pred_check
      _
    $region11: #{tpu_custom_call.1} parent=1 // pred_check_branch
      %49 = sbr.rel (0) target = $region13
    $region12: #{tpu_custom_call.1} parent=1 // pred_region
      %51 = vsyncadd [#allocation6], 0
      %s52 = sshll.u32 %s2, 4
      %s53 = int_to_ptr.hbm [resolvable:$true] %s52
      %s54 = sshll.u32 [#allocation7], 4
      %s55 = int_to_ptr.vmem [resolvable:$true] %s54
      %60 = dma.hbm_to_vmem [thread:$0]  %s53, 4096, %s55, [#allocation6], 128, 128, 8
    $region13: #{tpu_custom_call.1} parent=1 // pred_fallthru
      _
    // Predicated region
    $region14: #{tpu_custom_call.1} parent=1 // pred_check
      _
    $region15: #{tpu_custom_call.1} parent=1 // pred_check_branch
      %62 = sbr.rel (0) target = $region17
    $region16: #{tpu_custom_call.1} parent=1 // pred_region
      %64 = vsyncadd [#allocation9], 0
      %s65 = sshll.u32 %s3, 4
      %s66 = int_to_ptr.hbm [resolvable:$true] %s65
      %s67 = sshll.u32 [#allocation8], 4
      %s68 = int_to_ptr.vmem [resolvable:$true] %s67
      %73 = dma.hbm_to_vmem [thread:$0]  %s66, 4096, %s68, [#allocation9], 128, 128, 8
    $region17: #{tpu_custom_call.1} parent=1 // pred_fallthru
      _
    // Predicated region
    $region18: #{tpu_custom_call.1} parent=1 // pred_check
      _
    $region19: #{tpu_custom_call.1} parent=1 // pred_check_branch
      %75 = sbr.rel (0) target = $region21
    $region20: #{tpu_custom_call.1} parent=1 // pred_region
      %77 = vsyncadd [#allocation9], 0
      %s78 = sshll.u32 %s4, 4
      %s79 = int_to_ptr.hbm [resolvable:$true] %s78
      %s80 = sshll.u32 [#allocation10], 4
      %s81 = int_to_ptr.vmem [resolvable:$true] %s80
      %86 = dma.hbm_to_vmem [thread:$0]  %s79, 4096, %s81, [#allocation9], 128, 128, 8
    $region21: #{tpu_custom_call.1} parent=1 // pred_fallthru
      _
    // Predicated region
    $region22: #{tpu_custom_call.1} parent=1 // pred_check
      _
    $region23: #{tpu_custom_call.1} parent=1 // pred_check_branch
      %88 = sbr.rel (0) target = $region25
    $region24: #{tpu_custom_call.1} parent=1 // pred_region
      %90 = vsyncadd [#allocation12], 0
      %s91 = sshll.u32 %s5, 4
      %s92 = int_to_ptr.hbm [resolvable:$true] %s91
      %s93 = sshll.u32 [#allocation11], 4
      %s94 = int_to_ptr.vmem [resolvable:$true] %s93
      %99 = dma.hbm_to_vmem [thread:$0]  %s92, 4096, %s94, [#allocation12], 128, 128, 8
    $region25: #{tpu_custom_call.1} parent=1 // pred_fallthru
      _
    // Predicated region
    $region26: #{tpu_custom_call.1} parent=1 // pred_check
      _
    $region27: #{tpu_custom_call.1} parent=1 // pred_check_branch
      %101 = sbr.rel (0) target = $region29
    $region28: #{tpu_custom_call.1} parent=1 // pred_region
      %103 = vsyncadd [#allocation12], 0
      %s104 = sshll.u32 %s6, 4
      %s105 = int_to_ptr.hbm [resolvable:$true] %s104
      %s106 = sshll.u32 [#allocation13], 4
      %s107 = int_to_ptr.vmem [resolvable:$true] %s106
      %112 = dma.hbm_to_vmem [thread:$0]  %s105, 4096, %s107, [#allocation12], 128, 128, 8
    $region29: #{tpu_custom_call.1} parent=1 // pred_fallthru
      _
    // Predicated region
    $region30: #{tpu_custom_call.1} parent=1 // pred_check
      _
    $region31: #{tpu_custom_call.1} parent=1 // pred_check_branch
      %114 = sbr.rel (0) target = $region33
    $region32: #{tpu_custom_call.1} parent=1 // pred_region
      %116 = vsyncadd [#allocation15], 0
      %s117 = sshll.u32 %s7, 4
      %s118 = int_to_ptr.hbm [resolvable:$true] %s117
      %s119 = sshll.u32 [#allocation14], 4
      %s120 = int_to_ptr.vmem [resolvable:$true] %s119
      %125 = dma.hbm_to_vmem [thread:$0]  %s118, 2048, %s120, [#allocation15], 64, 64, 4
    $region33: #{tpu_custom_call.1} parent=1 // pred_fallthru
      _
    // Predicated region
    $region34: #{tpu_custom_call.1} parent=1 // pred_check
      _
    $region35: #{tpu_custom_call.1} parent=1 // pred_check_branch
      %127 = sbr.rel (0) target = $region37
    $region36: #{tpu_custom_call.1} parent=1 // pred_region
      %129 = vsyncadd [#allocation15], 0
      %s130 = sshll.u32 %s8, 4
      %s131 = int_to_ptr.hbm [resolvable:$true] %s130
      %s132 = sshll.u32 [#allocation16], 4
      %s133 = int_to_ptr.vmem [resolvable:$true] %s132
      %138 = dma.hbm_to_vmem [thread:$0]  %s131, 2048, %s133, [#allocation15], 64, 64, 4
    $region37: #{tpu_custom_call.1} parent=1 // pred_fallthru
      _
    // Predicated region
    $region38: #{tpu_custom_call.1} parent=1 // pred_check
      _
    $region39: #{tpu_custom_call.1} parent=1 // pred_check_branch
      %140 = sbr.rel (0) target = $region41
    $region40: #{tpu_custom_call.1} parent=1 // pred_region
      %142 = vsyncadd [#allocation18], 0
      %s144 = sshll.u32 %s9, 4
      %s145 = int_to_ptr.hbm [resolvable:$true] %s144
      %s146 = sshll.u32 [#allocation17], 4
      %s147 = int_to_ptr.vmem [resolvable:$true] %s146
      %149 = dma.hbm_to_vmem [thread:$0]  %s145, 256, %s147, [#allocation18]
    $region41: #{tpu_custom_call.1} parent=1 // pred_fallthru
      _
    // Predicated region
    $region42: #{tpu_custom_call.1} parent=1 // pred_check
      _
    $region43: #{tpu_custom_call.1} parent=1 // pred_check_branch
      %151 = sbr.rel (0) target = $region45
    $region44: #{tpu_custom_call.1} parent=1 // pred_region
      %153 = dma.done [#allocation3], 128
    $region45: #{tpu_custom_call.1} parent=1 // pred_fallthru
      _
    // Predicated region
    $region46: #{tpu_custom_call.1} parent=1 // pred_check
      _
    $region47: #{tpu_custom_call.1} parent=1 // pred_check_branch
      %155 = sbr.rel (0) target = $region49
    $region48: #{tpu_custom_call.1} parent=1 // pred_region
      %157 = dma.done [#allocation6], 1024
    $region49: #{tpu_custom_call.1} parent=1 // pred_fallthru
      _
    // Predicated region
    $region50: #{tpu_custom_call.1} parent=1 // pred_check
      _
    $region51: #{tpu_custom_call.1} parent=1 // pred_check_branch
      %159 = sbr.rel (0) target = $region53
    $region52: #{tpu_custom_call.1} parent=1 // pred_region
      %161 = dma.done [#allocation6], 4096
    $region53: #{tpu_custom_call.1} parent=1 // pred_fallthru
      _
    // Predicated region
    $region54: #{tpu_custom_call.1} parent=1 // pred_check
      _
    $region55: #{tpu_custom_call.1} parent=1 // pred_check_branch
      %163 = sbr.rel (0) target = $region57
    $region56: #{tpu_custom_call.1} parent=1 // pred_region
      %165 = dma.done [#allocation9], 4096
    $region57: #{tpu_custom_call.1} parent=1 // pred_fallthru
      _
    // Predicated region
    $region58: #{tpu_custom_call.1} parent=1 // pred_check
      _
    $region59: #{tpu_custom_call.1} parent=1 // pred_check_branch
      %167 = sbr.rel (0) target = $region61
    $region60: #{tpu_custom_call.1} parent=1 // pred_region
      %169 = dma.done [#allocation9], 4096
    $region61: #{tpu_custom_call.1} parent=1 // pred_fallthru
      _
    // Predicated region
    $region62: #{tpu_custom_call.1} parent=1 // pred_check
      _
    $region63: #{tpu_custom_call.1} parent=1 // pred_check_branch
      %171 = sbr.rel (0) target = $region65
    $region64: #{tpu_custom_call.1} parent=1 // pred_region
      %173 = dma.done [#allocation12], 4096
    $region65: #{tpu_custom_call.1} parent=1 // pred_fallthru
      _
    // Predicated region
    $region66: #{tpu_custom_call.1} parent=1 // pred_check
      _
    $region67: #{tpu_custom_call.1} parent=1 // pred_check_branch
      %175 = sbr.rel (0) target = $region69
    $region68: #{tpu_custom_call.1} parent=1 // pred_region
      %177 = dma.done [#allocation12], 4096
    $region69: #{tpu_custom_call.1} parent=1 // pred_fallthru
      _
    // Predicated region
    $region70: #{tpu_custom_call.1} parent=1 // pred_check
      _
    $region71: #{tpu_custom_call.1} parent=1 // pred_check_branch
      %179 = sbr.rel (0) target = $region73
    $region72: #{tpu_custom_call.1} parent=1 // pred_region
      %181 = dma.done [#allocation15], 2048
    $region73: #{tpu_custom_call.1} parent=1 // pred_fallthru
      _
    // Predicated region
    $region74: #{tpu_custom_call.1} parent=1 // pred_check
      _
    $region75: #{tpu_custom_call.1} parent=1 // pred_check_branch
      %183 = sbr.rel (0) target = $region77
    $region76: #{tpu_custom_call.1} parent=1 // pred_region
      %185 = dma.done [#allocation15], 2048
    $region77: #{tpu_custom_call.1} parent=1 // pred_fallthru
      _
    // Predicated region
    $region78: #{tpu_custom_call.1} parent=1 // pred_check
      _
    $region79: #{tpu_custom_call.1} parent=1 // pred_check_branch
      %187 = sbr.rel (0) target = $region81
    $region80: #{tpu_custom_call.1} parent=1 // pred_region
      %189 = dma.done [#allocation18], 256
    $region81: #{tpu_custom_call.1} parent=1 // pred_fallthru
      _
    %v191 = vld [vmem:[#allocation17] ss:$8 sm:$0x3]
    %s192 = scalar_lea.vmem [#allocation17], 1
    %v193 = vld [vmem:[%s192] ss:$8 sm:$0x3]
    %s194 = scalar_lea.vmem [#allocation17], 2
    %v195 = vld [vmem:[%s194] ss:$8 sm:$0x3]
    %s196 = scalar_lea.vmem [#allocation17], 3
    %v197 = vld [vmem:[%s196] ss:$8 sm:$0x3]
    %v198 = vld [vmem:[#allocation17 + $0x4] ss:$0 sm:$0xff]
    %v199 = vld [vmem:[#allocation2] sm:$0xf]
    %v200 = vld [vmem:[#allocation2 + $0x4] sm:$0xf]
    %v201 = vld [vmem:[#allocation5] sm:$0xff]
    %v202 = vld [vmem:[#allocation5 + $0x8] sm:$0xff]
    %v203 = vld [vmem:[#allocation5 + $0x10] sm:$0xff]
    %v204 = vld [vmem:[#allocation5 + $0x18] sm:$0xff]
    %v205 = vld [vmem:[#allocation5 + $0x20] sm:$0xff]
    %v206 = vld [vmem:[#allocation5 + $0x28] sm:$0xff]
    %v207 = vld [vmem:[#allocation5 + $0x30] sm:$0xff]
    %v208 = vld [vmem:[#allocation5 + $0x38] sm:$0xff]
    %v211 = vunpack.c.l.b16 %v199
    %v212 = vunpack.c.l.b16 %v200
    %v213 = vpack.c.b16 %v212, %v211
    %v222 = vunpack.c.l.b16 %v201
    %v223 = vunpack.c.h.b16 %v201
    %v224 = vunpack.c.l.b16 %v202
    %v225 = vunpack.c.h.b16 %v202
    %v226 = vunpack.c.l.b16 %v203
    %v227 = vunpack.c.h.b16 %v203
    %v228 = vunpack.c.l.b16 %v204
    %v229 = vunpack.c.h.b16 %v204
    %v230 = vunpack.c.l.b16 %v205
    %v231 = vunpack.c.h.b16 %v205
    %v232 = vunpack.c.l.b16 %v206
    %v233 = vunpack.c.h.b16 %v206
    %v234 = vunpack.c.l.b16 %v207
    %v235 = vunpack.c.h.b16 %v207
    %v236 = vunpack.c.l.b16 %v208
    %v237 = vunpack.c.h.b16 %v208
    %v238 = vpack.c.b16 %v226, %v222
    %v239 = vpack.c.b16 %v227, %v223
    %v240 = vpack.c.b16 %v228, %v224
    %v241 = vpack.c.b16 %v229, %v225
    %v242 = vpack.c.b16 %v234, %v230
    %v243 = vpack.c.b16 %v235, %v231
    %v244 = vpack.c.b16 %v236, %v232
    %v245 = vpack.c.b16 %v237, %v233
    %vm254 = vcmask 261120
    %v256 = vsel %vm254, %v213, 0
    %258 = vmatpush.bf16.msra.mxu0 0
    %259 = vmatpush.bf16.msra.mxu0 0
    %260 = vmatpush.bf16.msra.mxu0 0
    %261 = vmatpush.bf16.msra.mxu0 0
    %262 = vmatpush.bf16.msra.mxu0 0
    %263 = vmatpush.bf16.msra.mxu0 0
    %264 = vmatpush.bf16.msra.mxu0 %v242
    %265 = vmatpush.bf16.msra.mxu0 %v238
    %266 = vmatmul.bf16.gmra.mxu0 %v256
    %v267 = vpop.f32.mrf.mxu0
    %v268 = vadd.f32 0.0, %v267
    %v269 = vpop.f32.mrf.mxu0
    %v270 = vadd.f32 0.0, %v269
    %271 = vdwg.mxu0
    %272 = vmatpush.bf16.msra.mxu0 0
    %273 = vmatpush.bf16.msra.mxu0 0
    %274 = vmatpush.bf16.msra.mxu0 0
    %275 = vmatpush.bf16.msra.mxu0 0
    %276 = vmatpush.bf16.msra.mxu0 0
    %277 = vmatpush.bf16.msra.mxu0 0
    %278 = vmatpush.bf16.msra.mxu0 %v243
    %279 = vmatpush.bf16.msra.mxu0 %v239
    %280 = vmatmul.bf16.gmra.mxu0 %v256
    %v281 = vpop.f32.mrf.mxu0
    %v282 = vadd.f32 0.0, %v281
    %v283 = vpop.f32.mrf.mxu0
    %v284 = vadd.f32 0.0, %v283
    %285 = vdwg.mxu0
    %286 = vmatpush.bf16.msra.mxu0 0
    %287 = vmatpush.bf16.msra.mxu0 0
    %288 = vmatpush.bf16.msra.mxu0 0
    %289 = vmatpush.bf16.msra.mxu0 0
    %290 = vmatpush.bf16.msra.mxu0 0
    %291 = vmatpush.bf16.msra.mxu0 0
    %292 = vmatpush.bf16.msra.mxu0 %v244
    %293 = vmatpush.bf16.msra.mxu0 %v240
    %294 = vmatmul.bf16.gmra.mxu0 %v256
    %v295 = vpop.f32.mrf.mxu0
    %v296 = vadd.f32 0.0, %v295
    %v297 = vpop.f32.mrf.mxu0
    %v298 = vadd.f32 0.0, %v297
    %299 = vdwg.mxu0
    %300 = vmatpush.bf16.msra.mxu0 0
    %301 = vmatpush.bf16.msra.mxu0 0
    %302 = vmatpush.bf16.msra.mxu0 0
    %303 = vmatpush.bf16.msra.mxu0 0
    %304 = vmatpush.bf16.msra.mxu0 0
    %305 = vmatpush.bf16.msra.mxu0 0
    %306 = vmatpush.bf16.msra.mxu0 %v245
    %307 = vmatpush.bf16.msra.mxu0 %v241
    %308 = vmatmul.bf16.gmra.mxu0 %v256
    %v309 = vpop.f32.mrf.mxu0
    %v310 = vadd.f32 0.0, %v309
    %v311 = vpop.f32.mrf.mxu0
    %v312 = vadd.f32 0.0, %v311
    %313 = vdwg.mxu0
    %v315 = vperm.slane %v191, 0
    %v316 = vperm.slane %v191, 1
    %v319 = vadd.f32 %v268, %v315
    %v320 = vadd.f32 %v282, %v316
    %v321 = vadd.f32 %v270, %v315
    %v322 = vadd.f32 %v284, %v316
    %vm323 = vcmp.gt.f32.partialorder %v319, 0.0
    %vm324 = vcmp.gt.f32.partialorder %v320, 0.0
    %vm325 = vcmp.gt.f32.partialorder %v321, 0.0
    %vm326 = vcmp.gt.f32.partialorder %v322, 0.0
    %v327 = vmul.f32 %v319, 0.01
    %v328 = vmul.f32 %v320, 0.01
    %v329 = vmul.f32 %v321, 0.01
    %v330 = vmul.f32 %v322, 0.01
    %v331 = vsel %vm323, %v319, %v327
    %v332 = vsel %vm324, %v320, %v328
    %v333 = vsel %vm325, %v321, %v329
    %v334 = vsel %vm326, %v322, %v330
    %v335 = vpack.c.bf16 %v333, %v331
    %v336 = vpack.c.bf16 %v334, %v332
    %v337 = vld [vmem:[#allocation7] sm:$0xff]
    %v338 = vld [vmem:[#allocation7 + $0x8] sm:$0xff]
    %v339 = vld [vmem:[#allocation7 + $0x10] sm:$0xff]
    %v340 = vld [vmem:[#allocation7 + $0x18] sm:$0xff]
    %v341 = vld [vmem:[#allocation7 + $0x20] sm:$0xff]
    %v342 = vld [vmem:[#allocation7 + $0x28] sm:$0xff]
    %v343 = vld [vmem:[#allocation7 + $0x30] sm:$0xff]
    %v344 = vld [vmem:[#allocation7 + $0x38] sm:$0xff]
    %v345 = vld [vmem:[#allocation7 + $0x40] sm:$0xff]
    %v346 = vld [vmem:[#allocation7 + $0x48] sm:$0xff]
    %v347 = vld [vmem:[#allocation7 + $0x50] sm:$0xff]
    %v348 = vld [vmem:[#allocation7 + $0x58] sm:$0xff]
    %v349 = vld [vmem:[#allocation7 + $0x60] sm:$0xff]
    %v350 = vld [vmem:[#allocation7 + $0x68] sm:$0xff]
    %v351 = vld [vmem:[#allocation7 + $0x70] sm:$0xff]
    %v352 = vld [vmem:[#allocation7 + $0x78] sm:$0xff]
    %v353 = vld [vmem:[#allocation7 + $0x80] sm:$0xff]
    %v354 = vld [vmem:[#allocation7 + $0x88] sm:$0xff]
    %v355 = vld [vmem:[#allocation7 + $0x90] sm:$0xff]
    %v356 = vld [vmem:[#allocation7 + $0x98] sm:$0xff]
    %v357 = vld [vmem:[#allocation7 + $0xa0] sm:$0xff]
    %v358 = vld [vmem:[#allocation7 + $0xa8] sm:$0xff]
    %v359 = vld [vmem:[#allocation7 + $0xb0] sm:$0xff]
    %v360 = vld [vmem:[#allocation7 + $0xb8] sm:$0xff]
    %v361 = vld [vmem:[#allocation7 + $0xc0] sm:$0xff]
    %v362 = vld [vmem:[#allocation7 + $0xc8] sm:$0xff]
    %v363 = vld [vmem:[#allocation7 + $0xd0] sm:$0xff]
    %v364 = vld [vmem:[#allocation7 + $0xd8] sm:$0xff]
    %v365 = vld [vmem:[#allocation7 + $0xe0] sm:$0xff]
    %v366 = vld [vmem:[#allocation7 + $0xe8] sm:$0xff]
    %v367 = vld [vmem:[#allocation7 + $0xf0] sm:$0xff]
    %v368 = vld [vmem:[#allocation7 + $0xf8] sm:$0xff]
    %v401 = vunpack.c.l.b16 %v337
    %v402 = vunpack.c.h.b16 %v337
    %v403 = vunpack.c.l.b16 %v338
    %v404 = vunpack.c.h.b16 %v338
    %v405 = vunpack.c.l.b16 %v339
    %v406 = vunpack.c.h.b16 %v339
    %v407 = vunpack.c.l.b16 %v340
    %v408 = vunpack.c.h.b16 %v340
    %v409 = vunpack.c.l.b16 %v341
    %v410 = vunpack.c.h.b16 %v341
    %v411 = vunpack.c.l.b16 %v342
    %v412 = vunpack.c.h.b16 %v342
    %v413 = vunpack.c.l.b16 %v343
    %v414 = vunpack.c.h.b16 %v343
    %v415 = vunpack.c.l.b16 %v344
    %v416 = vunpack.c.h.b16 %v344
    %v417 = vunpack.c.l.b16 %v345
    %v418 = vunpack.c.h.b16 %v345
    %v419 = vunpack.c.l.b16 %v346
    %v420 = vunpack.c.h.b16 %v346
    %v421 = vunpack.c.l.b16 %v347
    %v422 = vunpack.c.h.b16 %v347
    %v423 = vunpack.c.l.b16 %v348
    %v424 = vunpack.c.h.b16 %v348
    %v425 = vunpack.c.l.b16 %v349
    %v426 = vunpack.c.h.b16 %v349
    %v427 = vunpack.c.l.b16 %v350
    %v428 = vunpack.c.h.b16 %v350
    %v429 = vunpack.c.l.b16 %v351
    %v430 = vunpack.c.h.b16 %v351
    %v431 = vunpack.c.l.b16 %v352
    %v432 = vunpack.c.h.b16 %v352
    %v433 = vunpack.c.l.b16 %v353
    %v434 = vunpack.c.h.b16 %v353
    %v435 = vunpack.c.l.b16 %v354
    %v436 = vunpack.c.h.b16 %v354
    %v437 = vunpack.c.l.b16 %v355
    %v438 = vunpack.c.h.b16 %v355
    %v439 = vunpack.c.l.b16 %v356
    %v440 = vunpack.c.h.b16 %v356
    %v441 = vunpack.c.l.b16 %v357
    %v442 = vunpack.c.h.b16 %v357
    %v443 = vunpack.c.l.b16 %v358
    %v444 = vunpack.c.h.b16 %v358
    %v445 = vunpack.c.l.b16 %v359
    %v446 = vunpack.c.h.b16 %v359
    %v447 = vunpack.c.l.b16 %v360
    %v448 = vunpack.c.h.b16 %v360
    %v449 = vunpack.c.l.b16 %v361
    %v450 = vunpack.c.h.b16 %v361
    %v451 = vunpack.c.l.b16 %v362
    %v452 = vunpack.c.h.b16 %v362
    %v453 = vunpack.c.l.b16 %v363
    %v454 = vunpack.c.h.b16 %v363
    %v455 = vunpack.c.l.b16 %v364
    %v456 = vunpack.c.h.b16 %v364
    %v457 = vunpack.c.l.b16 %v365
    %v458 = vunpack.c.h.b16 %v365
    %v459 = vunpack.c.l.b16 %v366
    %v460 = vunpack.c.h.b16 %v366
    %v461 = vunpack.c.l.b16 %v367
    %v462 = vunpack.c.h.b16 %v367
    %v463 = vunpack.c.l.b16 %v368
    %v464 = vunpack.c.h.b16 %v368
    %v465 = vpack.c.b16 %v403, %v401
    %v466 = vpack.c.b16 %v404, %v402
    %v467 = vpack.c.b16 %v407, %v405
    %v468 = vpack.c.b16 %v408, %v406
    %v469 = vpack.c.b16 %v411, %v409
    %v470 = vpack.c.b16 %v412, %v410
    %v471 = vpack.c.b16 %v415, %v413
    %v472 = vpack.c.b16 %v416, %v414
    %v473 = vpack.c.b16 %v419, %v417
    %v474 = vpack.c.b16 %v420, %v418
    %v475 = vpack.c.b16 %v423, %v421
    %v476 = vpack.c.b16 %v424, %v422
    %v477 = vpack.c.b16 %v427, %v425
    %v478 = vpack.c.b16 %v428, %v426
    %v479 = vpack.c.b16 %v431, %v429
    %v480 = vpack.c.b16 %v432, %v430
    %v481 = vpack.c.b16 %v435, %v433
    %v482 = vpack.c.b16 %v436, %v434
    %v483 = vpack.c.b16 %v439, %v437
    %v484 = vpack.c.b16 %v440, %v438
    %v485 = vpack.c.b16 %v443, %v441
    %v486 = vpack.c.b16 %v444, %v442
    %v487 = vpack.c.b16 %v447, %v445
    %v488 = vpack.c.b16 %v448, %v446
    %v489 = vpack.c.b16 %v451, %v449
    %v490 = vpack.c.b16 %v452, %v450
    %v491 = vpack.c.b16 %v455, %v453
    %v492 = vpack.c.b16 %v456, %v454
    %v493 = vpack.c.b16 %v459, %v457
    %v494 = vpack.c.b16 %v460, %v458
    %v495 = vpack.c.b16 %v463, %v461
    %v496 = vpack.c.b16 %v464, %v462
    %529 = vmatpush.bf16.msra.mxu0 %v479
    %530 = vmatpush.bf16.msra.mxu0 %v477
    %531 = vmatpush.bf16.msra.mxu0 %v475
    %532 = vmatpush.bf16.msra.mxu0 %v473
    %533 = vmatpush.bf16.msra.mxu0 %v471
    %534 = vmatpush.bf16.msra.mxu0 %v469
    %535 = vmatpush.bf16.msra.mxu0 %v467
    %536 = vmatpush.bf16.msra.mxu0 %v465
    %537 = vmatmul.bf16.gmra.mxu0 %v335
    %v538 = vpop.f32.mrf.mxu0
    %v539 = vadd.f32 0.0, %v538
    %v540 = vpop.f32.mrf.mxu0
    %v541 = vadd.f32 0.0, %v540
    %542 = vdwg.mxu0
    %543 = vmatpush.bf16.msra.mxu0 %v495
    %544 = vmatpush.bf16.msra.mxu0 %v493
    %545 = vmatpush.bf16.msra.mxu0 %v491
    %546 = vmatpush.bf16.msra.mxu0 %v489
    %547 = vmatpush.bf16.msra.mxu0 %v487
    %548 = vmatpush.bf16.msra.mxu0 %v485
    %549 = vmatpush.bf16.msra.mxu0 %v483
    %550 = vmatpush.bf16.msra.mxu0 %v481
    %551 = vmatmul.bf16.gmra.mxu0 %v336
    %v552 = vpop.f32.mrf.mxu0
    %v553 = vadd.f32 %v539, %v552
    %v554 = vpop.f32.mrf.mxu0
    %v555 = vadd.f32 %v541, %v554
    %556 = vdwg.mxu0
    %557 = vmatpush.bf16.msra.mxu0 %v480
    %558 = vmatpush.bf16.msra.mxu0 %v478
    %559 = vmatpush.bf16.msra.mxu0 %v476
    %560 = vmatpush.bf16.msra.mxu0 %v474
    %561 = vmatpush.bf16.msra.mxu0 %v472
    %562 = vmatpush.bf16.msra.mxu0 %v470
    %563 = vmatpush.bf16.msra.mxu0 %v468
    %564 = vmatpush.bf16.msra.mxu0 %v466
    %565 = vmatmul.bf16.gmra.mxu0 %v335
    %v566 = vpop.f32.mrf.mxu0
    %v567 = vadd.f32 0.0, %v566
    %v568 = vpop.f32.mrf.mxu0
    %v569 = vadd.f32 0.0, %v568
    %570 = vdwg.mxu0
    %571 = vmatpush.bf16.msra.mxu0 %v496
    %572 = vmatpush.bf16.msra.mxu0 %v494
    %573 = vmatpush.bf16.msra.mxu0 %v492
    %574 = vmatpush.bf16.msra.mxu0 %v490
    %575 = vmatpush.bf16.msra.mxu0 %v488
    %576 = vmatpush.bf16.msra.mxu0 %v486
    %577 = vmatpush.bf16.msra.mxu0 %v484
    %578 = vmatpush.bf16.msra.mxu0 %v482
    %579 = vmatmul.bf16.gmra.mxu0 %v336
    %v580 = vpop.f32.mrf.mxu0
    %v581 = vadd.f32 %v567, %v580
    %v582 = vpop.f32.mrf.mxu0
    %v583 = vadd.f32 %v569, %v582
    %584 = vdwg.mxu0
    %v585 = vadd.f32 %v296, %v553
    %v586 = vadd.f32 %v310, %v581
    %v587 = vadd.f32 %v298, %v555
    %v588 = vadd.f32 %v312, %v583
    %v590 = vperm.slane %v193, 0
    %v591 = vperm.slane %v193, 1
    %v594 = vadd.f32 %v585, %v590
    %v595 = vadd.f32 %v586, %v591
    %v596 = vadd.f32 %v587, %v590
    %v597 = vadd.f32 %v588, %v591
    %vm598 = vcmp.gt.f32.partialorder %v594, 0.0
    %vm599 = vcmp.gt.f32.partialorder %v595, 0.0
    %vm600 = vcmp.gt.f32.partialorder %v596, 0.0
    %vm601 = vcmp.gt.f32.partialorder %v597, 0.0
    %v602 = vmul.f32 %v594, 0.01
    %v603 = vmul.f32 %v595, 0.01
    %v604 = vmul.f32 %v596, 0.01
    %v605 = vmul.f32 %v597, 0.01
    %v606 = vsel %vm598, %v594, %v602
    %v607 = vsel %vm599, %v595, %v603
    %v608 = vsel %vm600, %v596, %v604
    %v609 = vsel %vm601, %v597, %v605
    %v610 = vpack.c.bf16 %v608, %v606
    %v611 = vpack.c.bf16 %v609, %v607
    %v612 = vld [vmem:[#allocation8] sm:$0xff]
    %v613 = vld [vmem:[#allocation8 + $0x8] sm:$0xff]
    %v614 = vld [vmem:[#allocation8 + $0x10] sm:$0xff]
    %v615 = vld [vmem:[#allocation8 + $0x18] sm:$0xff]
    %v616 = vld [vmem:[#allocation8 + $0x20] sm:$0xff]
    %v617 = vld [vmem:[#allocation8 + $0x28] sm:$0xff]
    %v618 = vld [vmem:[#allocation8 + $0x30] sm:$0xff]
    %v619 = vld [vmem:[#allocation8 + $0x38] sm:$0xff]
    %v620 = vld [vmem:[#allocation8 + $0x40] sm:$0xff]
    %v621 = vld [vmem:[#allocation8 + $0x48] sm:$0xff]
    %v622 = vld [vmem:[#allocation8 + $0x50] sm:$0xff]
    %v623 = vld [vmem:[#allocation8 + $0x58] sm:$0xff]
    %v624 = vld [vmem:[#allocation8 + $0x60] sm:$0xff]
    %v625 = vld [vmem:[#allocation8 + $0x68] sm:$0xff]
    %v626 = vld [vmem:[#allocation8 + $0x70] sm:$0xff]
    %v627 = vld [vmem:[#allocation8 + $0x78] sm:$0xff]
    %v628 = vld [vmem:[#allocation8 + $0x80] sm:$0xff]
    %v629 = vld [vmem:[#allocation8 + $0x88] sm:$0xff]
    %v630 = vld [vmem:[#allocation8 + $0x90] sm:$0xff]
    %v631 = vld [vmem:[#allocation8 + $0x98] sm:$0xff]
    %v632 = vld [vmem:[#allocation8 + $0xa0] sm:$0xff]
    %v633 = vld [vmem:[#allocation8 + $0xa8] sm:$0xff]
    %v634 = vld [vmem:[#allocation8 + $0xb0] sm:$0xff]
    %v635 = vld [vmem:[#allocation8 + $0xb8] sm:$0xff]
    %v636 = vld [vmem:[#allocation8 + $0xc0] sm:$0xff]
    %v637 = vld [vmem:[#allocation8 + $0xc8] sm:$0xff]
    %v638 = vld [vmem:[#allocation8 + $0xd0] sm:$0xff]
    %v639 = vld [vmem:[#allocation8 + $0xd8] sm:$0xff]
    %v640 = vld [vmem:[#allocation8 + $0xe0] sm:$0xff]
    %v641 = vld [vmem:[#allocation8 + $0xe8] sm:$0xff]
    %v642 = vld [vmem:[#allocation8 + $0xf0] sm:$0xff]
    %v643 = vld [vmem:[#allocation8 + $0xf8] sm:$0xff]
    %v644 = vld [vmem:[#allocation10] sm:$0xff]
    %v645 = vld [vmem:[#allocation10 + $0x8] sm:$0xff]
    %v646 = vld [vmem:[#allocation10 + $0x10] sm:$0xff]
    %v647 = vld [vmem:[#allocation10 + $0x18] sm:$0xff]
    %v648 = vld [vmem:[#allocation10 + $0x20] sm:$0xff]
    %v649 = vld [vmem:[#allocation10 + $0x28] sm:$0xff]
    %v650 = vld [vmem:[#allocation10 + $0x30] sm:$0xff]
    %v651 = vld [vmem:[#allocation10 + $0x38] sm:$0xff]
    %v652 = vld [vmem:[#allocation10 + $0x40] sm:$0xff]
    %v653 = vld [vmem:[#allocation10 + $0x48] sm:$0xff]
    %v654 = vld [vmem:[#allocation10 + $0x50] sm:$0xff]
    %v655 = vld [vmem:[#allocation10 + $0x58] sm:$0xff]
    %v656 = vld [vmem:[#allocation10 + $0x60] sm:$0xff]
    %v657 = vld [vmem:[#allocation10 + $0x68] sm:$0xff]
    %v658 = vld [vmem:[#allocation10 + $0x70] sm:$0xff]
    %v659 = vld [vmem:[#allocation10 + $0x78] sm:$0xff]
    %v660 = vld [vmem:[#allocation10 + $0x80] sm:$0xff]
    %v661 = vld [vmem:[#allocation10 + $0x88] sm:$0xff]
    %v662 = vld [vmem:[#allocation10 + $0x90] sm:$0xff]
    %v663 = vld [vmem:[#allocation10 + $0x98] sm:$0xff]
    %v664 = vld [vmem:[#allocation10 + $0xa0] sm:$0xff]
    %v665 = vld [vmem:[#allocation10 + $0xa8] sm:$0xff]
    %v666 = vld [vmem:[#allocation10 + $0xb0] sm:$0xff]
    %v667 = vld [vmem:[#allocation10 + $0xb8] sm:$0xff]
    %v668 = vld [vmem:[#allocation10 + $0xc0] sm:$0xff]
    %v669 = vld [vmem:[#allocation10 + $0xc8] sm:$0xff]
    %v670 = vld [vmem:[#allocation10 + $0xd0] sm:$0xff]
    %v671 = vld [vmem:[#allocation10 + $0xd8] sm:$0xff]
    %v672 = vld [vmem:[#allocation10 + $0xe0] sm:$0xff]
    %v673 = vld [vmem:[#allocation10 + $0xe8] sm:$0xff]
    %v674 = vld [vmem:[#allocation10 + $0xf0] sm:$0xff]
    %v675 = vld [vmem:[#allocation10 + $0xf8] sm:$0xff]
    %v708 = vunpack.c.l.b16 %v644
    %v709 = vunpack.c.h.b16 %v644
    %v710 = vunpack.c.l.b16 %v645
    %v711 = vunpack.c.h.b16 %v645
    %v712 = vunpack.c.l.b16 %v646
    %v713 = vunpack.c.h.b16 %v646
    %v714 = vunpack.c.l.b16 %v647
    %v715 = vunpack.c.h.b16 %v647
    %v716 = vunpack.c.l.b16 %v648
    %v717 = vunpack.c.h.b16 %v648
    %v718 = vunpack.c.l.b16 %v649
    %v719 = vunpack.c.h.b16 %v649
    %v720 = vunpack.c.l.b16 %v650
    %v721 = vunpack.c.h.b16 %v650
    %v722 = vunpack.c.l.b16 %v651
    %v723 = vunpack.c.h.b16 %v651
    %v724 = vunpack.c.l.b16 %v652
    %v725 = vunpack.c.h.b16 %v652
    %v726 = vunpack.c.l.b16 %v653
    %v727 = vunpack.c.h.b16 %v653
    %v728 = vunpack.c.l.b16 %v654
    %v729 = vunpack.c.h.b16 %v654
    %v730 = vunpack.c.l.b16 %v655
    %v731 = vunpack.c.h.b16 %v655
    %v732 = vunpack.c.l.b16 %v656
    %v733 = vunpack.c.h.b16 %v656
    %v734 = vunpack.c.l.b16 %v657
    %v735 = vunpack.c.h.b16 %v657
    %v736 = vunpack.c.l.b16 %v658
    %v737 = vunpack.c.h.b16 %v658
    %v738 = vunpack.c.l.b16 %v659
    %v739 = vunpack.c.h.b16 %v659
    %v740 = vunpack.c.l.b16 %v660
    %v741 = vunpack.c.h.b16 %v660
    %v742 = vunpack.c.l.b16 %v661
    %v743 = vunpack.c.h.b16 %v661
    %v744 = vunpack.c.l.b16 %v662
    %v745 = vunpack.c.h.b16 %v662
    %v746 = vunpack.c.l.b16 %v663
    %v747 = vunpack.c.h.b16 %v663
    %v748 = vunpack.c.l.b16 %v664
    %v749 = vunpack.c.h.b16 %v664
    %v750 = vunpack.c.l.b16 %v665
    %v751 = vunpack.c.h.b16 %v665
    %v752 = vunpack.c.l.b16 %v666
    %v753 = vunpack.c.h.b16 %v666
    %v754 = vunpack.c.l.b16 %v667
    %v755 = vunpack.c.h.b16 %v667
    %v756 = vunpack.c.l.b16 %v668
    %v757 = vunpack.c.h.b16 %v668
    %v758 = vunpack.c.l.b16 %v669
    %v759 = vunpack.c.h.b16 %v669
    %v760 = vunpack.c.l.b16 %v670
    %v761 = vunpack.c.h.b16 %v670
    %v762 = vunpack.c.l.b16 %v671
    %v763 = vunpack.c.h.b16 %v671
    %v764 = vunpack.c.l.b16 %v672
    %v765 = vunpack.c.h.b16 %v672
    %v766 = vunpack.c.l.b16 %v673
    %v767 = vunpack.c.h.b16 %v673
    %v768 = vunpack.c.l.b16 %v674
    %v769 = vunpack.c.h.b16 %v674
    %v770 = vunpack.c.l.b16 %v675
    %v771 = vunpack.c.h.b16 %v675
    %v772 = vpack.c.b16 %v710, %v708
    %v773 = vpack.c.b16 %v711, %v709
    %v774 = vpack.c.b16 %v714, %v712
    %v775 = vpack.c.b16 %v715, %v713
    %v776 = vpack.c.b16 %v718, %v716
    %v777 = vpack.c.b16 %v719, %v717
    %v778 = vpack.c.b16 %v722, %v720
    %v779 = vpack.c.b16 %v723, %v721
    %v780 = vpack.c.b16 %v726, %v724
    %v781 = vpack.c.b16 %v727, %v725
    %v782 = vpack.c.b16 %v730, %v728
    %v783 = vpack.c.b16 %v731, %v729
    %v784 = vpack.c.b16 %v734, %v732
    %v785 = vpack.c.b16 %v735, %v733
    %v786 = vpack.c.b16 %v738, %v736
    %v787 = vpack.c.b16 %v739, %v737
    %v788 = vpack.c.b16 %v742, %v740
    %v789 = vpack.c.b16 %v743, %v741
    %v790 = vpack.c.b16 %v746, %v744
    %v791 = vpack.c.b16 %v747, %v745
    %v792 = vpack.c.b16 %v750, %v748
    %v793 = vpack.c.b16 %v751, %v749
    %v794 = vpack.c.b16 %v754, %v752
    %v795 = vpack.c.b16 %v755, %v753
    %v796 = vpack.c.b16 %v758, %v756
    %v797 = vpack.c.b16 %v759, %v757
    %v798 = vpack.c.b16 %v762, %v760
    %v799 = vpack.c.b16 %v763, %v761
    %v800 = vpack.c.b16 %v766, %v764
    %v801 = vpack.c.b16 %v767, %v765
    %v802 = vpack.c.b16 %v770, %v768
    %v803 = vpack.c.b16 %v771, %v769
    %836 = vmatpush.bf16.msra.mxu0 %v786
    %837 = vmatpush.bf16.msra.mxu0 %v784
    %838 = vmatpush.bf16.msra.mxu0 %v782
    %839 = vmatpush.bf16.msra.mxu0 %v780
    %840 = vmatpush.bf16.msra.mxu0 %v778
    %841 = vmatpush.bf16.msra.mxu0 %v776
    %842 = vmatpush.bf16.msra.mxu0 %v774
    %843 = vmatpush.bf16.msra.mxu0 %v772
    %844 = vmatmul.bf16.gmra.mxu0 %v610
    %v845 = vpop.f32.mrf.mxu0
    %v846 = vadd.f32 0.0, %v845
    %v847 = vpop.f32.mrf.mxu0
    %v848 = vadd.f32 0.0, %v847
    %849 = vdwg.mxu0
    %850 = vmatpush.bf16.msra.mxu0 %v802
    %851 = vmatpush.bf16.msra.mxu0 %v800
    %852 = vmatpush.bf16.msra.mxu0 %v798
    %853 = vmatpush.bf16.msra.mxu0 %v796
    %854 = vmatpush.bf16.msra.mxu0 %v794
    %855 = vmatpush.bf16.msra.mxu0 %v792
    %856 = vmatpush.bf16.msra.mxu0 %v790
    %857 = vmatpush.bf16.msra.mxu0 %v788
    %858 = vmatmul.bf16.gmra.mxu0 %v611
    %v859 = vpop.f32.mrf.mxu0
    %v860 = vadd.f32 %v846, %v859
    %v861 = vpop.f32.mrf.mxu0
    %v862 = vadd.f32 %v848, %v861
    %863 = vdwg.mxu0
    %864 = vmatpush.bf16.msra.mxu0 %v787
    %865 = vmatpush.bf16.msra.mxu0 %v785
    %866 = vmatpush.bf16.msra.mxu0 %v783
    %867 = vmatpush.bf16.msra.mxu0 %v781
    %868 = vmatpush.bf16.msra.mxu0 %v779
    %869 = vmatpush.bf16.msra.mxu0 %v777
    %870 = vmatpush.bf16.msra.mxu0 %v775
    %871 = vmatpush.bf16.msra.mxu0 %v773
    %872 = vmatmul.bf16.gmra.mxu0 %v610
    %v873 = vpop.f32.mrf.mxu0
    %v874 = vadd.f32 0.0, %v873
    %v875 = vpop.f32.mrf.mxu0
    %v876 = vadd.f32 0.0, %v875
    %877 = vdwg.mxu0
    %878 = vmatpush.bf16.msra.mxu0 %v803
    %879 = vmatpush.bf16.msra.mxu0 %v801
    %880 = vmatpush.bf16.msra.mxu0 %v799
    %881 = vmatpush.bf16.msra.mxu0 %v797
    %882 = vmatpush.bf16.msra.mxu0 %v795
    %883 = vmatpush.bf16.msra.mxu0 %v793
    %884 = vmatpush.bf16.msra.mxu0 %v791
    %885 = vmatpush.bf16.msra.mxu0 %v789
    %886 = vmatmul.bf16.gmra.mxu0 %v611
    %v887 = vpop.f32.mrf.mxu0
    %v888 = vadd.f32 %v874, %v887
    %v889 = vpop.f32.mrf.mxu0
    %v890 = vadd.f32 %v876, %v889
    %891 = vdwg.mxu0
    %v924 = vunpack.c.l.b16 %v612
    %v925 = vunpack.c.h.b16 %v612
    %v926 = vunpack.c.l.b16 %v613
    %v927 = vunpack.c.h.b16 %v613
    %v928 = vunpack.c.l.b16 %v614
    %v929 = vunpack.c.h.b16 %v614
    %v930 = vunpack.c.l.b16 %v615
    %v931 = vunpack.c.h.b16 %v615
    %v932 = vunpack.c.l.b16 %v616
    %v933 = vunpack.c.h.b16 %v616
    %v934 = vunpack.c.l.b16 %v617
    %v935 = vunpack.c.h.b16 %v617
    %v936 = vunpack.c.l.b16 %v618
    %v937 = vunpack.c.h.b16 %v618
    %v938 = vunpack.c.l.b16 %v619
    %v939 = vunpack.c.h.b16 %v619
    %v940 = vunpack.c.l.b16 %v620
    %v941 = vunpack.c.h.b16 %v620
    %v942 = vunpack.c.l.b16 %v621
    %v943 = vunpack.c.h.b16 %v621
    %v944 = vunpack.c.l.b16 %v622
    %v945 = vunpack.c.h.b16 %v622
    %v946 = vunpack.c.l.b16 %v623
    %v947 = vunpack.c.h.b16 %v623
    %v948 = vunpack.c.l.b16 %v624
    %v949 = vunpack.c.h.b16 %v624
    %v950 = vunpack.c.l.b16 %v625
    %v951 = vunpack.c.h.b16 %v625
    %v952 = vunpack.c.l.b16 %v626
    %v953 = vunpack.c.h.b16 %v626
    %v954 = vunpack.c.l.b16 %v627
    %v955 = vunpack.c.h.b16 %v627
    %v956 = vunpack.c.l.b16 %v628
    %v957 = vunpack.c.h.b16 %v628
    %v958 = vunpack.c.l.b16 %v629
    %v959 = vunpack.c.h.b16 %v629
    %v960 = vunpack.c.l.b16 %v630
    %v961 = vunpack.c.h.b16 %v630
    %v962 = vunpack.c.l.b16 %v631
    %v963 = vunpack.c.h.b16 %v631
    %v964 = vunpack.c.l.b16 %v632
    %v965 = vunpack.c.h.b16 %v632
    %v966 = vunpack.c.l.b16 %v633
    %v967 = vunpack.c.h.b16 %v633
    %v968 = vunpack.c.l.b16 %v634
    %v969 = vunpack.c.h.b16 %v634
    %v970 = vunpack.c.l.b16 %v635
    %v971 = vunpack.c.h.b16 %v635
    %v972 = vunpack.c.l.b16 %v636
    %v973 = vunpack.c.h.b16 %v636
    %v974 = vunpack.c.l.b16 %v637
    %v975 = vunpack.c.h.b16 %v637
    %v976 = vunpack.c.l.b16 %v638
    %v977 = vunpack.c.h.b16 %v638
    %v978 = vunpack.c.l.b16 %v639
    %v979 = vunpack.c.h.b16 %v639
    %v980 = vunpack.c.l.b16 %v640
    %v981 = vunpack.c.h.b16 %v640
    %v982 = vunpack.c.l.b16 %v641
    %v983 = vunpack.c.h.b16 %v641
    %v984 = vunpack.c.l.b16 %v642
    %v985 = vunpack.c.h.b16 %v642
    %v986 = vunpack.c.l.b16 %v643
    %v987 = vunpack.c.h.b16 %v643
    %v988 = vpack.c.b16 %v926, %v924
    %v989 = vpack.c.b16 %v927, %v925
    %v990 = vpack.c.b16 %v930, %v928
    %v991 = vpack.c.b16 %v931, %v929
    %v992 = vpack.c.b16 %v934, %v932
    %v993 = vpack.c.b16 %v935, %v933
    %v994 = vpack.c.b16 %v938, %v936
    %v995 = vpack.c.b16 %v939, %v937
    %v996 = vpack.c.b16 %v942, %v940
    %v997 = vpack.c.b16 %v943, %v941
    %v998 = vpack.c.b16 %v946, %v944
    %v999 = vpack.c.b16 %v947, %v945
    %v1000 = vpack.c.b16 %v950, %v948
    %v1001 = vpack.c.b16 %v951, %v949
    %v1002 = vpack.c.b16 %v954, %v952
    %v1003 = vpack.c.b16 %v955, %v953
    %v1004 = vpack.c.b16 %v958, %v956
    %v1005 = vpack.c.b16 %v959, %v957
    %v1006 = vpack.c.b16 %v962, %v960
    %v1007 = vpack.c.b16 %v963, %v961
    %v1008 = vpack.c.b16 %v966, %v964
    %v1009 = vpack.c.b16 %v967, %v965
    %v1010 = vpack.c.b16 %v970, %v968
    %v1011 = vpack.c.b16 %v971, %v969
    %v1012 = vpack.c.b16 %v974, %v972
    %v1013 = vpack.c.b16 %v975, %v973
    %v1014 = vpack.c.b16 %v978, %v976
    %v1015 = vpack.c.b16 %v979, %v977
    %v1016 = vpack.c.b16 %v982, %v980
    %v1017 = vpack.c.b16 %v983, %v981
    %v1018 = vpack.c.b16 %v986, %v984
    %v1019 = vpack.c.b16 %v987, %v985
    %1052 = vmatpush.bf16.msra.mxu0 %v1002
    %1053 = vmatpush.bf16.msra.mxu0 %v1000
    %1054 = vmatpush.bf16.msra.mxu0 %v998
    %1055 = vmatpush.bf16.msra.mxu0 %v996
    %1056 = vmatpush.bf16.msra.mxu0 %v994
    %1057 = vmatpush.bf16.msra.mxu0 %v992
    %1058 = vmatpush.bf16.msra.mxu0 %v990
    %1059 = vmatpush.bf16.msra.mxu0 %v988
    %1060 = vmatmul.bf16.gmra.mxu0 %v335
    %v1061 = vpop.f32.mrf.mxu0
    %v1062 = vadd.f32 %v860, %v1061
    %v1063 = vpop.f32.mrf.mxu0
    %v1064 = vadd.f32 %v862, %v1063
    %1065 = vdwg.mxu0
    %1066 = vmatpush.bf16.msra.mxu0 %v1018
    %1067 = vmatpush.bf16.msra.mxu0 %v1016
    %1068 = vmatpush.bf16.msra.mxu0 %v1014
    %1069 = vmatpush.bf16.msra.mxu0 %v1012
    %1070 = vmatpush.bf16.msra.mxu0 %v1010
    %1071 = vmatpush.bf16.msra.mxu0 %v1008
    %1072 = vmatpush.bf16.msra.mxu0 %v1006
    %1073 = vmatpush.bf16.msra.mxu0 %v1004
    %1074 = vmatmul.bf16.gmra.mxu0 %v336
    %v1075 = vpop.f32.mrf.mxu0
    %v1076 = vadd.f32 %v1062, %v1075
    %v1077 = vpop.f32.mrf.mxu0
    %v1078 = vadd.f32 %v1064, %v1077
    %1079 = vdwg.mxu0
    %1080 = vmatpush.bf16.msra.mxu0 %v1003
    %1081 = vmatpush.bf16.msra.mxu0 %v1001
    %1082 = vmatpush.bf16.msra.mxu0 %v999
    %1083 = vmatpush.bf16.msra.mxu0 %v997
    %1084 = vmatpush.bf16.msra.mxu0 %v995
    %1085 = vmatpush.bf16.msra.mxu0 %v993
    %1086 = vmatpush.bf16.msra.mxu0 %v991
    %1087 = vmatpush.bf16.msra.mxu0 %v989
    %1088 = vmatmul.bf16.gmra.mxu0 %v335
    %v1089 = vpop.f32.mrf.mxu0
    %v1090 = vadd.f32 %v888, %v1089
    %v1091 = vpop.f32.mrf.mxu0
    %v1092 = vadd.f32 %v890, %v1091
    %1093 = vdwg.mxu0
    %1094 = vmatpush.bf16.msra.mxu0 %v1019
    %1095 = vmatpush.bf16.msra.mxu0 %v1017
    %1096 = vmatpush.bf16.msra.mxu0 %v1015
    %1097 = vmatpush.bf16.msra.mxu0 %v1013
    %1098 = vmatpush.bf16.msra.mxu0 %v1011
    %1099 = vmatpush.bf16.msra.mxu0 %v1009
    %1100 = vmatpush.bf16.msra.mxu0 %v1007
    %1101 = vmatpush.bf16.msra.mxu0 %v1005
    %1102 = vmatmul.bf16.gmra.mxu0 %v336
    %v1103 = vpop.f32.mrf.mxu0
    %v1104 = vadd.f32 %v1090, %v1103
    %v1105 = vpop.f32.mrf.mxu0
    %v1106 = vadd.f32 %v1092, %v1105
    %1107 = vdwg.mxu0
    %v1109 = vperm.slane %v195, 0
    %v1110 = vperm.slane %v195, 1
    %v1113 = vadd.f32 %v1076, %v1109
    %v1114 = vadd.f32 %v1104, %v1110
    %v1115 = vadd.f32 %v1078, %v1109
    %v1116 = vadd.f32 %v1106, %v1110
    %vm1117 = vcmp.gt.f32.partialorder %v1113, 0.0
    %vm1118 = vcmp.gt.f32.partialorder %v1114, 0.0
    %vm1119 = vcmp.gt.f32.partialorder %v1115, 0.0
    %vm1120 = vcmp.gt.f32.partialorder %v1116, 0.0
    %v1121 = vmul.f32 %v1113, 0.01
    %v1122 = vmul.f32 %v1114, 0.01
    %v1123 = vmul.f32 %v1115, 0.01
    %v1124 = vmul.f32 %v1116, 0.01
    %v1125 = vsel %vm1117, %v1113, %v1121
    %v1126 = vsel %vm1118, %v1114, %v1122
    %v1127 = vsel %vm1119, %v1115, %v1123
    %v1128 = vsel %vm1120, %v1116, %v1124
    %v1129 = vpack.c.bf16 %v1127, %v1125
    %v1130 = vpack.c.bf16 %v1128, %v1126
    %v1131 = vld [vmem:[#allocation11] sm:$0xff]
    %v1132 = vld [vmem:[#allocation11 + $0x8] sm:$0xff]
    %v1133 = vld [vmem:[#allocation11 + $0x10] sm:$0xff]
    %v1134 = vld [vmem:[#allocation11 + $0x18] sm:$0xff]
    %v1135 = vld [vmem:[#allocation11 + $0x20] sm:$0xff]
    %v1136 = vld [vmem:[#allocation11 + $0x28] sm:$0xff]
    %v1137 = vld [vmem:[#allocation11 + $0x30] sm:$0xff]
    %v1138 = vld [vmem:[#allocation11 + $0x38] sm:$0xff]
    %v1139 = vld [vmem:[#allocation11 + $0x40] sm:$0xff]
    %v1140 = vld [vmem:[#allocation11 + $0x48] sm:$0xff]
    %v1141 = vld [vmem:[#allocation11 + $0x50] sm:$0xff]
    %v1142 = vld [vmem:[#allocation11 + $0x58] sm:$0xff]
    %v1143 = vld [vmem:[#allocation11 + $0x60] sm:$0xff]
    %v1144 = vld [vmem:[#allocation11 + $0x68] sm:$0xff]
    %v1145 = vld [vmem:[#allocation11 + $0x70] sm:$0xff]
    %v1146 = vld [vmem:[#allocation11 + $0x78] sm:$0xff]
    %v1147 = vld [vmem:[#allocation11 + $0x80] sm:$0xff]
    %v1148 = vld [vmem:[#allocation11 + $0x88] sm:$0xff]
    %v1149 = vld [vmem:[#allocation11 + $0x90] sm:$0xff]
    %v1150 = vld [vmem:[#allocation11 + $0x98] sm:$0xff]
    %v1151 = vld [vmem:[#allocation11 + $0xa0] sm:$0xff]
    %v1152 = vld [vmem:[#allocation11 + $0xa8] sm:$0xff]
    %v1153 = vld [vmem:[#allocation11 + $0xb0] sm:$0xff]
    %v1154 = vld [vmem:[#allocation11 + $0xb8] sm:$0xff]
    %v1155 = vld [vmem:[#allocation11 + $0xc0] sm:$0xff]
    %v1156 = vld [vmem:[#allocation11 + $0xc8] sm:$0xff]
    %v1157 = vld [vmem:[#allocation11 + $0xd0] sm:$0xff]
    %v1158 = vld [vmem:[#allocation11 + $0xd8] sm:$0xff]
    %v1159 = vld [vmem:[#allocation11 + $0xe0] sm:$0xff]
    %v1160 = vld [vmem:[#allocation11 + $0xe8] sm:$0xff]
    %v1161 = vld [vmem:[#allocation11 + $0xf0] sm:$0xff]
    %v1162 = vld [vmem:[#allocation11 + $0xf8] sm:$0xff]
    %v1163 = vld [vmem:[#allocation13] sm:$0xff]
    %v1164 = vld [vmem:[#allocation13 + $0x8] sm:$0xff]
    %v1165 = vld [vmem:[#allocation13 + $0x10] sm:$0xff]
    %v1166 = vld [vmem:[#allocation13 + $0x18] sm:$0xff]
    %v1167 = vld [vmem:[#allocation13 + $0x20] sm:$0xff]
    %v1168 = vld [vmem:[#allocation13 + $0x28] sm:$0xff]
    %v1169 = vld [vmem:[#allocation13 + $0x30] sm:$0xff]
    %v1170 = vld [vmem:[#allocation13 + $0x38] sm:$0xff]
    %v1171 = vld [vmem:[#allocation13 + $0x40] sm:$0xff]
    %v1172 = vld [vmem:[#allocation13 + $0x48] sm:$0xff]
    %v1173 = vld [vmem:[#allocation13 + $0x50] sm:$0xff]
    %v1174 = vld [vmem:[#allocation13 + $0x58] sm:$0xff]
    %v1175 = vld [vmem:[#allocation13 + $0x60] sm:$0xff]
    %v1176 = vld [vmem:[#allocation13 + $0x68] sm:$0xff]
    %v1177 = vld [vmem:[#allocation13 + $0x70] sm:$0xff]
    %v1178 = vld [vmem:[#allocation13 + $0x78] sm:$0xff]
    %v1179 = vld [vmem:[#allocation13 + $0x80] sm:$0xff]
    %v1180 = vld [vmem:[#allocation13 + $0x88] sm:$0xff]
    %v1181 = vld [vmem:[#allocation13 + $0x90] sm:$0xff]
    %v1182 = vld [vmem:[#allocation13 + $0x98] sm:$0xff]
    %v1183 = vld [vmem:[#allocation13 + $0xa0] sm:$0xff]
    %v1184 = vld [vmem:[#allocation13 + $0xa8] sm:$0xff]
    %v1185 = vld [vmem:[#allocation13 + $0xb0] sm:$0xff]
    %v1186 = vld [vmem:[#allocation13 + $0xb8] sm:$0xff]
    %v1187 = vld [vmem:[#allocation13 + $0xc0] sm:$0xff]
    %v1188 = vld [vmem:[#allocation13 + $0xc8] sm:$0xff]
    %v1189 = vld [vmem:[#allocation13 + $0xd0] sm:$0xff]
    %v1190 = vld [vmem:[#allocation13 + $0xd8] sm:$0xff]
    %v1191 = vld [vmem:[#allocation13 + $0xe0] sm:$0xff]
    %v1192 = vld [vmem:[#allocation13 + $0xe8] sm:$0xff]
    %v1193 = vld [vmem:[#allocation13 + $0xf0] sm:$0xff]
    %v1194 = vld [vmem:[#allocation13 + $0xf8] sm:$0xff]
    %v1227 = vunpack.c.l.b16 %v1163
    %v1228 = vunpack.c.h.b16 %v1163
    %v1229 = vunpack.c.l.b16 %v1164
    %v1230 = vunpack.c.h.b16 %v1164
    %v1231 = vunpack.c.l.b16 %v1165
    %v1232 = vunpack.c.h.b16 %v1165
    %v1233 = vunpack.c.l.b16 %v1166
    %v1234 = vunpack.c.h.b16 %v1166
    %v1235 = vunpack.c.l.b16 %v1167
    %v1236 = vunpack.c.h.b16 %v1167
    %v1237 = vunpack.c.l.b16 %v1168
    %v1238 = vunpack.c.h.b16 %v1168
    %v1239 = vunpack.c.l.b16 %v1169
    %v1240 = vunpack.c.h.b16 %v1169
    %v1241 = vunpack.c.l.b16 %v1170
    %v1242 = vunpack.c.h.b16 %v1170
    %v1243 = vunpack.c.l.b16 %v1171
    %v1244 = vunpack.c.h.b16 %v1171
    %v1245 = vunpack.c.l.b16 %v1172
    %v1246 = vunpack.c.h.b16 %v1172
    %v1247 = vunpack.c.l.b16 %v1173
    %v1248 = vunpack.c.h.b16 %v1173
    %v1249 = vunpack.c.l.b16 %v1174
    %v1250 = vunpack.c.h.b16 %v1174
    %v1251 = vunpack.c.l.b16 %v1175
    %v1252 = vunpack.c.h.b16 %v1175
    %v1253 = vunpack.c.l.b16 %v1176
    %v1254 = vunpack.c.h.b16 %v1176
    %v1255 = vunpack.c.l.b16 %v1177
    %v1256 = vunpack.c.h.b16 %v1177
    %v1257 = vunpack.c.l.b16 %v1178
    %v1258 = vunpack.c.h.b16 %v1178
    %v1259 = vunpack.c.l.b16 %v1179
    %v1260 = vunpack.c.h.b16 %v1179
    %v1261 = vunpack.c.l.b16 %v1180
    %v1262 = vunpack.c.h.b16 %v1180
    %v1263 = vunpack.c.l.b16 %v1181
    %v1264 = vunpack.c.h.b16 %v1181
    %v1265 = vunpack.c.l.b16 %v1182
    %v1266 = vunpack.c.h.b16 %v1182
    %v1267 = vunpack.c.l.b16 %v1183
    %v1268 = vunpack.c.h.b16 %v1183
    %v1269 = vunpack.c.l.b16 %v1184
    %v1270 = vunpack.c.h.b16 %v1184
    %v1271 = vunpack.c.l.b16 %v1185
    %v1272 = vunpack.c.h.b16 %v1185
    %v1273 = vunpack.c.l.b16 %v1186
    %v1274 = vunpack.c.h.b16 %v1186
    %v1275 = vunpack.c.l.b16 %v1187
    %v1276 = vunpack.c.h.b16 %v1187
    %v1277 = vunpack.c.l.b16 %v1188
    %v1278 = vunpack.c.h.b16 %v1188
    %v1279 = vunpack.c.l.b16 %v1189
    %v1280 = vunpack.c.h.b16 %v1189
    %v1281 = vunpack.c.l.b16 %v1190
    %v1282 = vunpack.c.h.b16 %v1190
    %v1283 = vunpack.c.l.b16 %v1191
    %v1284 = vunpack.c.h.b16 %v1191
    %v1285 = vunpack.c.l.b16 %v1192
    %v1286 = vunpack.c.h.b16 %v1192
    %v1287 = vunpack.c.l.b16 %v1193
    %v1288 = vunpack.c.h.b16 %v1193
    %v1289 = vunpack.c.l.b16 %v1194
    %v1290 = vunpack.c.h.b16 %v1194
    %v1291 = vpack.c.b16 %v1229, %v1227
    %v1292 = vpack.c.b16 %v1230, %v1228
    %v1293 = vpack.c.b16 %v1233, %v1231
    %v1294 = vpack.c.b16 %v1234, %v1232
    %v1295 = vpack.c.b16 %v1237, %v1235
    %v1296 = vpack.c.b16 %v1238, %v1236
    %v1297 = vpack.c.b16 %v1241, %v1239
    %v1298 = vpack.c.b16 %v1242, %v1240
    %v1299 = vpack.c.b16 %v1245, %v1243
    %v1300 = vpack.c.b16 %v1246, %v1244
    %v1301 = vpack.c.b16 %v1249, %v1247
    %v1302 = vpack.c.b16 %v1250, %v1248
    %v1303 = vpack.c.b16 %v1253, %v1251
    %v1304 = vpack.c.b16 %v1254, %v1252
    %v1305 = vpack.c.b16 %v1257, %v1255
    %v1306 = vpack.c.b16 %v1258, %v1256
    %v1307 = vpack.c.b16 %v1261, %v1259
    %v1308 = vpack.c.b16 %v1262, %v1260
    %v1309 = vpack.c.b16 %v1265, %v1263
    %v1310 = vpack.c.b16 %v1266, %v1264
    %v1311 = vpack.c.b16 %v1269, %v1267
    %v1312 = vpack.c.b16 %v1270, %v1268
    %v1313 = vpack.c.b16 %v1273, %v1271
    %v1314 = vpack.c.b16 %v1274, %v1272
    %v1315 = vpack.c.b16 %v1277, %v1275
    %v1316 = vpack.c.b16 %v1278, %v1276
    %v1317 = vpack.c.b16 %v1281, %v1279
    %v1318 = vpack.c.b16 %v1282, %v1280
    %v1319 = vpack.c.b16 %v1285, %v1283
    %v1320 = vpack.c.b16 %v1286, %v1284
    %v1321 = vpack.c.b16 %v1289, %v1287
    %v1322 = vpack.c.b16 %v1290, %v1288
    %1355 = vmatpush.bf16.msra.mxu0 %v1305
    %1356 = vmatpush.bf16.msra.mxu0 %v1303
    %1357 = vmatpush.bf16.msra.mxu0 %v1301
    %1358 = vmatpush.bf16.msra.mxu0 %v1299
    %1359 = vmatpush.bf16.msra.mxu0 %v1297
    %1360 = vmatpush.bf16.msra.mxu0 %v1295
    %1361 = vmatpush.bf16.msra.mxu0 %v1293
    %1362 = vmatpush.bf16.msra.mxu0 %v1291
    %1363 = vmatmul.bf16.gmra.mxu0 %v1129
    %v1364 = vpop.f32.mrf.mxu0
    %v1365 = vadd.f32 0.0, %v1364
    %v1366 = vpop.f32.mrf.mxu0
    %v1367 = vadd.f32 0.0, %v1366
    %1368 = vdwg.mxu0
    %1369 = vmatpush.bf16.msra.mxu0 %v1321
    %1370 = vmatpush.bf16.msra.mxu0 %v1319
    %1371 = vmatpush.bf16.msra.mxu0 %v1317
    %1372 = vmatpush.bf16.msra.mxu0 %v1315
    %1373 = vmatpush.bf16.msra.mxu0 %v1313
    %1374 = vmatpush.bf16.msra.mxu0 %v1311
    %1375 = vmatpush.bf16.msra.mxu0 %v1309
    %1376 = vmatpush.bf16.msra.mxu0 %v1307
    %1377 = vmatmul.bf16.gmra.mxu0 %v1130
    %v1378 = vpop.f32.mrf.mxu0
    %v1379 = vadd.f32 %v1365, %v1378
    %v1380 = vpop.f32.mrf.mxu0
    %v1381 = vadd.f32 %v1367, %v1380
    %1382 = vdwg.mxu0
    %1383 = vmatpush.bf16.msra.mxu0 %v1306
    %1384 = vmatpush.bf16.msra.mxu0 %v1304
    %1385 = vmatpush.bf16.msra.mxu0 %v1302
    %1386 = vmatpush.bf16.msra.mxu0 %v1300
    %1387 = vmatpush.bf16.msra.mxu0 %v1298
    %1388 = vmatpush.bf16.msra.mxu0 %v1296
    %1389 = vmatpush.bf16.msra.mxu0 %v1294
    %1390 = vmatpush.bf16.msra.mxu0 %v1292
    %1391 = vmatmul.bf16.gmra.mxu0 %v1129
    %v1392 = vpop.f32.mrf.mxu0
    %v1393 = vadd.f32 0.0, %v1392
    %v1394 = vpop.f32.mrf.mxu0
    %v1395 = vadd.f32 0.0, %v1394
    %1396 = vdwg.mxu0
    %1397 = vmatpush.bf16.msra.mxu0 %v1322
    %1398 = vmatpush.bf16.msra.mxu0 %v1320
    %1399 = vmatpush.bf16.msra.mxu0 %v1318
    %1400 = vmatpush.bf16.msra.mxu0 %v1316
    %1401 = vmatpush.bf16.msra.mxu0 %v1314
    %1402 = vmatpush.bf16.msra.mxu0 %v1312
    %1403 = vmatpush.bf16.msra.mxu0 %v1310
    %1404 = vmatpush.bf16.msra.mxu0 %v1308
    %1405 = vmatmul.bf16.gmra.mxu0 %v1130
    %v1406 = vpop.f32.mrf.mxu0
    %v1407 = vadd.f32 %v1393, %v1406
    %v1408 = vpop.f32.mrf.mxu0
    %v1409 = vadd.f32 %v1395, %v1408
    %1410 = vdwg.mxu0
    %v1443 = vunpack.c.l.b16 %v1131
    %v1444 = vunpack.c.h.b16 %v1131
    %v1445 = vunpack.c.l.b16 %v1132
    %v1446 = vunpack.c.h.b16 %v1132
    %v1447 = vunpack.c.l.b16 %v1133
    %v1448 = vunpack.c.h.b16 %v1133
    %v1449 = vunpack.c.l.b16 %v1134
    %v1450 = vunpack.c.h.b16 %v1134
    %v1451 = vunpack.c.l.b16 %v1135
    %v1452 = vunpack.c.h.b16 %v1135
    %v1453 = vunpack.c.l.b16 %v1136
    %v1454 = vunpack.c.h.b16 %v1136
    %v1455 = vunpack.c.l.b16 %v1137
    %v1456 = vunpack.c.h.b16 %v1137
    %v1457 = vunpack.c.l.b16 %v1138
    %v1458 = vunpack.c.h.b16 %v1138
    %v1459 = vunpack.c.l.b16 %v1139
    %v1460 = vunpack.c.h.b16 %v1139
    %v1461 = vunpack.c.l.b16 %v1140
    %v1462 = vunpack.c.h.b16 %v1140
    %v1463 = vunpack.c.l.b16 %v1141
    %v1464 = vunpack.c.h.b16 %v1141
    %v1465 = vunpack.c.l.b16 %v1142
    %v1466 = vunpack.c.h.b16 %v1142
    %v1467 = vunpack.c.l.b16 %v1143
    %v1468 = vunpack.c.h.b16 %v1143
    %v1469 = vunpack.c.l.b16 %v1144
    %v1470 = vunpack.c.h.b16 %v1144
    %v1471 = vunpack.c.l.b16 %v1145
    %v1472 = vunpack.c.h.b16 %v1145
    %v1473 = vunpack.c.l.b16 %v1146
    %v1474 = vunpack.c.h.b16 %v1146
    %v1475 = vunpack.c.l.b16 %v1147
    %v1476 = vunpack.c.h.b16 %v1147
    %v1477 = vunpack.c.l.b16 %v1148
    %v1478 = vunpack.c.h.b16 %v1148
    %v1479 = vunpack.c.l.b16 %v1149
    %v1480 = vunpack.c.h.b16 %v1149
    %v1481 = vunpack.c.l.b16 %v1150
    %v1482 = vunpack.c.h.b16 %v1150
    %v1483 = vunpack.c.l.b16 %v1151
    %v1484 = vunpack.c.h.b16 %v1151
    %v1485 = vunpack.c.l.b16 %v1152
    %v1486 = vunpack.c.h.b16 %v1152
    %v1487 = vunpack.c.l.b16 %v1153
    %v1488 = vunpack.c.h.b16 %v1153
    %v1489 = vunpack.c.l.b16 %v1154
    %v1490 = vunpack.c.h.b16 %v1154
    %v1491 = vunpack.c.l.b16 %v1155
    %v1492 = vunpack.c.h.b16 %v1155
    %v1493 = vunpack.c.l.b16 %v1156
    %v1494 = vunpack.c.h.b16 %v1156
    %v1495 = vunpack.c.l.b16 %v1157
    %v1496 = vunpack.c.h.b16 %v1157
    %v1497 = vunpack.c.l.b16 %v1158
    %v1498 = vunpack.c.h.b16 %v1158
    %v1499 = vunpack.c.l.b16 %v1159
    %v1500 = vunpack.c.h.b16 %v1159
    %v1501 = vunpack.c.l.b16 %v1160
    %v1502 = vunpack.c.h.b16 %v1160
    %v1503 = vunpack.c.l.b16 %v1161
    %v1504 = vunpack.c.h.b16 %v1161
    %v1505 = vunpack.c.l.b16 %v1162
    %v1506 = vunpack.c.h.b16 %v1162
    %v1507 = vpack.c.b16 %v1445, %v1443
    %v1508 = vpack.c.b16 %v1446, %v1444
    %v1509 = vpack.c.b16 %v1449, %v1447
    %v1510 = vpack.c.b16 %v1450, %v1448
    %v1511 = vpack.c.b16 %v1453, %v1451
    %v1512 = vpack.c.b16 %v1454, %v1452
    %v1513 = vpack.c.b16 %v1457, %v1455
    %v1514 = vpack.c.b16 %v1458, %v1456
    %v1515 = vpack.c.b16 %v1461, %v1459
    %v1516 = vpack.c.b16 %v1462, %v1460
    %v1517 = vpack.c.b16 %v1465, %v1463
    %v1518 = vpack.c.b16 %v1466, %v1464
    %v1519 = vpack.c.b16 %v1469, %v1467
    %v1520 = vpack.c.b16 %v1470, %v1468
    %v1521 = vpack.c.b16 %v1473, %v1471
    %v1522 = vpack.c.b16 %v1474, %v1472
    %v1523 = vpack.c.b16 %v1477, %v1475
    %v1524 = vpack.c.b16 %v1478, %v1476
    %v1525 = vpack.c.b16 %v1481, %v1479
    %v1526 = vpack.c.b16 %v1482, %v1480
    %v1527 = vpack.c.b16 %v1485, %v1483
    %v1528 = vpack.c.b16 %v1486, %v1484
    %v1529 = vpack.c.b16 %v1489, %v1487
    %v1530 = vpack.c.b16 %v1490, %v1488
    %v1531 = vpack.c.b16 %v1493, %v1491
    %v1532 = vpack.c.b16 %v1494, %v1492
    %v1533 = vpack.c.b16 %v1497, %v1495
    %v1534 = vpack.c.b16 %v1498, %v1496
    %v1535 = vpack.c.b16 %v1501, %v1499
    %v1536 = vpack.c.b16 %v1502, %v1500
    %v1537 = vpack.c.b16 %v1505, %v1503
    %v1538 = vpack.c.b16 %v1506, %v1504
    %1571 = vmatpush.bf16.msra.mxu0 %v1521
    %1572 = vmatpush.bf16.msra.mxu0 %v1519
    %1573 = vmatpush.bf16.msra.mxu0 %v1517
    %1574 = vmatpush.bf16.msra.mxu0 %v1515
    %1575 = vmatpush.bf16.msra.mxu0 %v1513
    %1576 = vmatpush.bf16.msra.mxu0 %v1511
    %1577 = vmatpush.bf16.msra.mxu0 %v1509
    %1578 = vmatpush.bf16.msra.mxu0 %v1507
    %1579 = vmatmul.bf16.gmra.mxu0 %v610
    %v1580 = vpop.f32.mrf.mxu0
    %v1581 = vadd.f32 %v1379, %v1580
    %v1582 = vpop.f32.mrf.mxu0
    %v1583 = vadd.f32 %v1381, %v1582
    %1584 = vdwg.mxu0
    %1585 = vmatpush.bf16.msra.mxu0 %v1537
    %1586 = vmatpush.bf16.msra.mxu0 %v1535
    %1587 = vmatpush.bf16.msra.mxu0 %v1533
    %1588 = vmatpush.bf16.msra.mxu0 %v1531
    %1589 = vmatpush.bf16.msra.mxu0 %v1529
    %1590 = vmatpush.bf16.msra.mxu0 %v1527
    %1591 = vmatpush.bf16.msra.mxu0 %v1525
    %1592 = vmatpush.bf16.msra.mxu0 %v1523
    %1593 = vmatmul.bf16.gmra.mxu0 %v611
    %v1594 = vpop.f32.mrf.mxu0
    %v1595 = vadd.f32 %v1581, %v1594
    %v1596 = vpop.f32.mrf.mxu0
    %v1597 = vadd.f32 %v1583, %v1596
    %1598 = vdwg.mxu0
    %1599 = vmatpush.bf16.msra.mxu0 %v1522
    %1600 = vmatpush.bf16.msra.mxu0 %v1520
    %1601 = vmatpush.bf16.msra.mxu0 %v1518
    %1602 = vmatpush.bf16.msra.mxu0 %v1516
    %1603 = vmatpush.bf16.msra.mxu0 %v1514
    %1604 = vmatpush.bf16.msra.mxu0 %v1512
    %1605 = vmatpush.bf16.msra.mxu0 %v1510
    %1606 = vmatpush.bf16.msra.mxu0 %v1508
    %1607 = vmatmul.bf16.gmra.mxu0 %v610
    %v1608 = vpop.f32.mrf.mxu0
    %v1609 = vadd.f32 %v1407, %v1608
    %v1610 = vpop.f32.mrf.mxu0
    %v1611 = vadd.f32 %v1409, %v1610
    %1612 = vdwg.mxu0
    %1613 = vmatpush.bf16.msra.mxu0 %v1538
    %1614 = vmatpush.bf16.msra.mxu0 %v1536
    %1615 = vmatpush.bf16.msra.mxu0 %v1534
    %1616 = vmatpush.bf16.msra.mxu0 %v1532
    %1617 = vmatpush.bf16.msra.mxu0 %v1530
    %1618 = vmatpush.bf16.msra.mxu0 %v1528
    %1619 = vmatpush.bf16.msra.mxu0 %v1526
    %1620 = vmatpush.bf16.msra.mxu0 %v1524
    %1621 = vmatmul.bf16.gmra.mxu0 %v611
    %v1622 = vpop.f32.mrf.mxu0
    %v1623 = vadd.f32 %v1609, %v1622
    %v1624 = vpop.f32.mrf.mxu0
    %v1625 = vadd.f32 %v1611, %v1624
    %1626 = vdwg.mxu0
    %v1628 = vperm.slane %v197, 0
    %v1629 = vperm.slane %v197, 1
    %v1632 = vadd.f32 %v1595, %v1628
    %v1633 = vadd.f32 %v1623, %v1629
    %v1634 = vadd.f32 %v1597, %v1628
    %v1635 = vadd.f32 %v1625, %v1629
    %vm1636 = vcmp.gt.f32.partialorder %v1632, 0.0
    %vm1637 = vcmp.gt.f32.partialorder %v1633, 0.0
    %vm1638 = vcmp.gt.f32.partialorder %v1634, 0.0
    %vm1639 = vcmp.gt.f32.partialorder %v1635, 0.0
    %v1640 = vmul.f32 %v1632, 0.01
    %v1641 = vmul.f32 %v1633, 0.01
    %v1642 = vmul.f32 %v1634, 0.01
    %v1643 = vmul.f32 %v1635, 0.01
    %v1644 = vsel %vm1636, %v1632, %v1640
    %v1645 = vsel %vm1637, %v1633, %v1641
    %v1646 = vsel %vm1638, %v1634, %v1642
    %v1647 = vsel %vm1639, %v1635, %v1643
    %v1648 = vpack.c.bf16 %v1646, %v1644
    %v1649 = vpack.c.bf16 %v1647, %v1645
    %v1650 = vld [vmem:[#allocation14] sm:$0xf]
    %v1651 = vld [vmem:[#allocation14 + $0x4] sm:$0xf]
    %v1652 = vld [vmem:[#allocation14 + $0x8] sm:$0xf]
    %v1653 = vld [vmem:[#allocation14 + $0xc] sm:$0xf]
    %v1654 = vld [vmem:[#allocation14 + $0x10] sm:$0xf]
    %v1655 = vld [vmem:[#allocation14 + $0x14] sm:$0xf]
    %v1656 = vld [vmem:[#allocation14 + $0x18] sm:$0xf]
    %v1657 = vld [vmem:[#allocation14 + $0x1c] sm:$0xf]
    %v1658 = vld [vmem:[#allocation14 + $0x20] sm:$0xf]
    %v1659 = vld [vmem:[#allocation14 + $0x24] sm:$0xf]
    %v1660 = vld [vmem:[#allocation14 + $0x28] sm:$0xf]
    %v1661 = vld [vmem:[#allocation14 + $0x2c] sm:$0xf]
    %v1662 = vld [vmem:[#allocation14 + $0x30] sm:$0xf]
    %v1663 = vld [vmem:[#allocation14 + $0x34] sm:$0xf]
    %v1664 = vld [vmem:[#allocation14 + $0x38] sm:$0xf]
    %v1665 = vld [vmem:[#allocation14 + $0x3c] sm:$0xf]
    %v1666 = vld [vmem:[#allocation14 + $0x40] sm:$0xf]
    %v1667 = vld [vmem:[#allocation14 + $0x44] sm:$0xf]
    %v1668 = vld [vmem:[#allocation14 + $0x48] sm:$0xf]
    %v1669 = vld [vmem:[#allocation14 + $0x4c] sm:$0xf]
    %v1670 = vld [vmem:[#allocation14 + $0x50] sm:$0xf]
    %v1671 = vld [vmem:[#allocation14 + $0x54] sm:$0xf]
    %v1672 = vld [vmem:[#allocation14 + $0x58] sm:$0xf]
    %v1673 = vld [vmem:[#allocation14 + $0x5c] sm:$0xf]
    %v1674 = vld [vmem:[#allocation14 + $0x60] sm:$0xf]
    %v1675 = vld [vmem:[#allocation14 + $0x64] sm:$0xf]
    %v1676 = vld [vmem:[#allocation14 + $0x68] sm:$0xf]
    %v1677 = vld [vmem:[#allocation14 + $0x6c] sm:$0xf]
    %v1678 = vld [vmem:[#allocation14 + $0x70] sm:$0xf]
    %v1679 = vld [vmem:[#allocation14 + $0x74] sm:$0xf]
    %v1680 = vld [vmem:[#allocation14 + $0x78] sm:$0xf]
    %v1681 = vld [vmem:[#allocation14 + $0x7c] sm:$0xf]
    %v1682 = vld [vmem:[#allocation16] sm:$0xf]
    %v1683 = vld [vmem:[#allocation16 + $0x4] sm:$0xf]
    %v1684 = vld [vmem:[#allocation16 + $0x8] sm:$0xf]
    %v1685 = vld [vmem:[#allocation16 + $0xc] sm:$0xf]
    %v1686 = vld [vmem:[#allocation16 + $0x10] sm:$0xf]
    %v1687 = vld [vmem:[#allocation16 + $0x14] sm:$0xf]
    %v1688 = vld [vmem:[#allocation16 + $0x18] sm:$0xf]
    %v1689 = vld [vmem:[#allocation16 + $0x1c] sm:$0xf]
    %v1690 = vld [vmem:[#allocation16 + $0x20] sm:$0xf]
    %v1691 = vld [vmem:[#allocation16 + $0x24] sm:$0xf]
    %v1692 = vld [vmem:[#allocation16 + $0x28] sm:$0xf]
    %v1693 = vld [vmem:[#allocation16 + $0x2c] sm:$0xf]
    %v1694 = vld [vmem:[#allocation16 + $0x30] sm:$0xf]
    %v1695 = vld [vmem:[#allocation16 + $0x34] sm:$0xf]
    %v1696 = vld [vmem:[#allocation16 + $0x38] sm:$0xf]
    %v1697 = vld [vmem:[#allocation16 + $0x3c] sm:$0xf]
    %v1698 = vld [vmem:[#allocation16 + $0x40] sm:$0xf]
    %v1699 = vld [vmem:[#allocation16 + $0x44] sm:$0xf]
    %v1700 = vld [vmem:[#allocation16 + $0x48] sm:$0xf]
    %v1701 = vld [vmem:[#allocation16 + $0x4c] sm:$0xf]
    %v1702 = vld [vmem:[#allocation16 + $0x50] sm:$0xf]
    %v1703 = vld [vmem:[#allocation16 + $0x54] sm:$0xf]
    %v1704 = vld [vmem:[#allocation16 + $0x58] sm:$0xf]
    %v1705 = vld [vmem:[#allocation16 + $0x5c] sm:$0xf]
    %v1706 = vld [vmem:[#allocation16 + $0x60] sm:$0xf]
    %v1707 = vld [vmem:[#allocation16 + $0x64] sm:$0xf]
    %v1708 = vld [vmem:[#allocation16 + $0x68] sm:$0xf]
    %v1709 = vld [vmem:[#allocation16 + $0x6c] sm:$0xf]
    %v1710 = vld [vmem:[#allocation16 + $0x70] sm:$0xf]
    %v1711 = vld [vmem:[#allocation16 + $0x74] sm:$0xf]
    %v1712 = vld [vmem:[#allocation16 + $0x78] sm:$0xf]
    %v1713 = vld [vmem:[#allocation16 + $0x7c] sm:$0xf]
    %v1746 = vunpack.c.l.b16 %v1682
    %v1747 = vunpack.c.l.b16 %v1683
    %v1748 = vunpack.c.l.b16 %v1684
    %v1749 = vunpack.c.l.b16 %v1685
    %v1750 = vunpack.c.l.b16 %v1686
    %v1751 = vunpack.c.l.b16 %v1687
    %v1752 = vunpack.c.l.b16 %v1688
    %v1753 = vunpack.c.l.b16 %v1689
    %v1754 = vunpack.c.l.b16 %v1690
    %v1755 = vunpack.c.l.b16 %v1691
    %v1756 = vunpack.c.l.b16 %v1692
    %v1757 = vunpack.c.l.b16 %v1693
    %v1758 = vunpack.c.l.b16 %v1694
    %v1759 = vunpack.c.l.b16 %v1695
    %v1760 = vunpack.c.l.b16 %v1696
    %v1761 = vunpack.c.l.b16 %v1697
    %v1762 = vunpack.c.l.b16 %v1698
    %v1763 = vunpack.c.l.b16 %v1699
    %v1764 = vunpack.c.l.b16 %v1700
    %v1765 = vunpack.c.l.b16 %v1701
    %v1766 = vunpack.c.l.b16 %v1702
    %v1767 = vunpack.c.l.b16 %v1703
    %v1768 = vunpack.c.l.b16 %v1704
    %v1769 = vunpack.c.l.b16 %v1705
    %v1770 = vunpack.c.l.b16 %v1706
    %v1771 = vunpack.c.l.b16 %v1707
    %v1772 = vunpack.c.l.b16 %v1708
    %v1773 = vunpack.c.l.b16 %v1709
    %v1774 = vunpack.c.l.b16 %v1710
    %v1775 = vunpack.c.l.b16 %v1711
    %v1776 = vunpack.c.l.b16 %v1712
    %v1777 = vunpack.c.l.b16 %v1713
    %v1778 = vpack.c.b16 %v1747, %v1746
    %v1779 = vpack.c.b16 %v1749, %v1748
    %v1780 = vpack.c.b16 %v1751, %v1750
    %v1781 = vpack.c.b16 %v1753, %v1752
    %v1782 = vpack.c.b16 %v1755, %v1754
    %v1783 = vpack.c.b16 %v1757, %v1756
    %v1784 = vpack.c.b16 %v1759, %v1758
    %v1785 = vpack.c.b16 %v1761, %v1760
    %v1786 = vpack.c.b16 %v1763, %v1762
    %v1787 = vpack.c.b16 %v1765, %v1764
    %v1788 = vpack.c.b16 %v1767, %v1766
    %v1789 = vpack.c.b16 %v1769, %v1768
    %v1790 = vpack.c.b16 %v1771, %v1770
    %v1791 = vpack.c.b16 %v1773, %v1772
    %v1792 = vpack.c.b16 %v1775, %v1774
    %v1793 = vpack.c.b16 %v1777, %v1776
    %1810 = vmatpush.bf16.msra.mxu0 %v1785
    %1811 = vmatpush.bf16.msra.mxu0 %v1784
    %1812 = vmatpush.bf16.msra.mxu0 %v1783
    %1813 = vmatpush.bf16.msra.mxu0 %v1782
    %1814 = vmatpush.bf16.msra.mxu0 %v1781
    %1815 = vmatpush.bf16.msra.mxu0 %v1780
    %1816 = vmatpush.bf16.msra.mxu0 %v1779
    %1817 = vmatpush.bf16.msra.mxu0 %v1778
    %1818 = vmatmul.bf16.gmra.mxu0 %v1648
    %v1819 = vpop.f32.mrf.mxu0
    %v1820 = vadd.f32 0.0, %v1819
    %v1821 = vpop.f32.mrf.mxu0
    %v1822 = vadd.f32 0.0, %v1821
    %1823 = vdwg.mxu0
    %1824 = vmatpush.bf16.msra.mxu0 %v1793
    %1825 = vmatpush.bf16.msra.mxu0 %v1792
    %1826 = vmatpush.bf16.msra.mxu0 %v1791
    %1827 = vmatpush.bf16.msra.mxu0 %v1790
    %1828 = vmatpush.bf16.msra.mxu0 %v1789
    %1829 = vmatpush.bf16.msra.mxu0 %v1788
    %1830 = vmatpush.bf16.msra.mxu0 %v1787
    %1831 = vmatpush.bf16.msra.mxu0 %v1786
    %1832 = vmatmul.bf16.gmra.mxu0 %v1649
    %v1833 = vpop.f32.mrf.mxu0
    %v1834 = vadd.f32 %v1820, %v1833
    %v1835 = vpop.f32.mrf.mxu0
    %v1836 = vadd.f32 %v1822, %v1835
    %1837 = vdwg.mxu0
    %v1870 = vunpack.c.l.b16 %v1650
    %v1871 = vunpack.c.l.b16 %v1651
    %v1872 = vunpack.c.l.b16 %v1652
    %v1873 = vunpack.c.l.b16 %v1653
    %v1874 = vunpack.c.l.b16 %v1654
    %v1875 = vunpack.c.l.b16 %v1655
    %v1876 = vunpack.c.l.b16 %v1656
    %v1877 = vunpack.c.l.b16 %v1657
    %v1878 = vunpack.c.l.b16 %v1658
    %v1879 = vunpack.c.l.b16 %v1659
    %v1880 = vunpack.c.l.b16 %v1660
    %v1881 = vunpack.c.l.b16 %v1661
    %v1882 = vunpack.c.l.b16 %v1662
    %v1883 = vunpack.c.l.b16 %v1663
    %v1884 = vunpack.c.l.b16 %v1664
    %v1885 = vunpack.c.l.b16 %v1665
    %v1886 = vunpack.c.l.b16 %v1666
    %v1887 = vunpack.c.l.b16 %v1667
    %v1888 = vunpack.c.l.b16 %v1668
    %v1889 = vunpack.c.l.b16 %v1669
    %v1890 = vunpack.c.l.b16 %v1670
    %v1891 = vunpack.c.l.b16 %v1671
    %v1892 = vunpack.c.l.b16 %v1672
    %v1893 = vunpack.c.l.b16 %v1673
    %v1894 = vunpack.c.l.b16 %v1674
    %v1895 = vunpack.c.l.b16 %v1675
    %v1896 = vunpack.c.l.b16 %v1676
    %v1897 = vunpack.c.l.b16 %v1677
    %v1898 = vunpack.c.l.b16 %v1678
    %v1899 = vunpack.c.l.b16 %v1679
    %v1900 = vunpack.c.l.b16 %v1680
    %v1901 = vunpack.c.l.b16 %v1681
    %v1902 = vpack.c.b16 %v1871, %v1870
    %v1903 = vpack.c.b16 %v1873, %v1872
    %v1904 = vpack.c.b16 %v1875, %v1874
    %v1905 = vpack.c.b16 %v1877, %v1876
    %v1906 = vpack.c.b16 %v1879, %v1878
    %v1907 = vpack.c.b16 %v1881, %v1880
    %v1908 = vpack.c.b16 %v1883, %v1882
    %v1909 = vpack.c.b16 %v1885, %v1884
    %v1910 = vpack.c.b16 %v1887, %v1886
    %v1911 = vpack.c.b16 %v1889, %v1888
    %v1912 = vpack.c.b16 %v1891, %v1890
    %v1913 = vpack.c.b16 %v1893, %v1892
    %v1914 = vpack.c.b16 %v1895, %v1894
    %v1915 = vpack.c.b16 %v1897, %v1896
    %v1916 = vpack.c.b16 %v1899, %v1898
    %v1917 = vpack.c.b16 %v1901, %v1900
    %1934 = vmatpush.bf16.msra.mxu0 %v1909
    %1935 = vmatpush.bf16.msra.mxu0 %v1908
    %1936 = vmatpush.bf16.msra.mxu0 %v1907
    %1937 = vmatpush.bf16.msra.mxu0 %v1906
    %1938 = vmatpush.bf16.msra.mxu0 %v1905
    %1939 = vmatpush.bf16.msra.mxu0 %v1904
    %1940 = vmatpush.bf16.msra.mxu0 %v1903
    %1941 = vmatpush.bf16.msra.mxu0 %v1902
    %1942 = vmatmul.bf16.gmra.mxu0 %v1129
    %v1943 = vpop.f32.mrf.mxu0
    %v1944 = vadd.f32 %v1834, %v1943
    %v1945 = vpop.f32.mrf.mxu0
    %v1946 = vadd.f32 %v1836, %v1945
    %1947 = vdwg.mxu0
    %1948 = vmatpush.bf16.msra.mxu0 %v1917
    %1949 = vmatpush.bf16.msra.mxu0 %v1916
    %1950 = vmatpush.bf16.msra.mxu0 %v1915
    %1951 = vmatpush.bf16.msra.mxu0 %v1914
    %1952 = vmatpush.bf16.msra.mxu0 %v1913
    %1953 = vmatpush.bf16.msra.mxu0 %v1912
    %1954 = vmatpush.bf16.msra.mxu0 %v1911
    %1955 = vmatpush.bf16.msra.mxu0 %v1910
    %1956 = vmatmul.bf16.gmra.mxu0 %v1130
    %v1957 = vpop.f32.mrf.mxu0
    %v1958 = vadd.f32 %v1944, %v1957
    %v1959 = vpop.f32.mrf.mxu0
    %v1960 = vadd.f32 %v1946, %v1959
    %1961 = vdwg.mxu0
    %v1962 = vadd.f32 %v1958, %v198
    %v1963 = vadd.f32 %v1960, %v198
    %1964 = vst [vmem:[#allocation19] sm:$0xff] %v1962
    %1965 = vst [vmem:[#allocation19 + $0x8] sm:$0xff] %v1963
    // Predicated region
    $region82: #{tpu_custom_call.1} parent=1 // pred_check
      _
    $region83: #{tpu_custom_call.1} parent=1 // pred_check_branch
      %1967 = sbr.rel (0) target = $region85
    $region84: #{tpu_custom_call.1} parent=1 // pred_region
      %1969 = vsyncadd [#allocation4], 0
      %s1970 = sshll.u32 [#allocation19], 4
      %s1971 = int_to_ptr.vmem [resolvable:$true] %s1970
      %s1972 = sshll.u32 %s10, 4
      %s1973 = int_to_ptr.hbm [resolvable:$true] %s1972
      %1978 = dma.vmem_to_hbm [thread:$0]  %s1971, 256, %s1973, [#allocation4], 128, 128, 8
    $region85: #{tpu_custom_call.1} parent=1 // pred_fallthru
      _
    // Predicated region
    $region86: #{tpu_custom_call.1} parent=1 // pred_check
      _
    $region87: #{tpu_custom_call.1} parent=1 // pred_check_branch
      %1980 = sbr.rel (0) target = $region89
    $region88: #{tpu_custom_call.1} parent=1 // pred_region
      %1982 = dma.done [#allocation4], 256
    $region89: #{tpu_custom_call.1} parent=1 // pred_fallthru
      _
    %1983 = vsyncpa [#allocation3], 1
    %1984 = vsyncpa [#allocation6], 1
    %1985 = vsyncpa [#allocation9], 1
    %1986 = vsyncpa [#allocation12], 1
    %1987 = vsyncpa [#allocation15], 1
    %1988 = vsyncpa [#allocation18], 1
    %1989 = vsyncpa [#allocation4], 1

</llo_original>
